<compile_context>
chip_gen: v5e
topology: v5e:2x2
jax: 0.10.0
libtpu: 0.0.40
codegen_flags: <defaults>
</compile_context>

<pallas_src>
import functools
import math

import jax
import jax.numpy as jnp
from jax import lax
from jax.experimental import pallas as pl
from jax.experimental.pallas import tpu as pltpu


# ----------------------------------------------------------------------------
# Fused forward kernel (BN -> block1 -> block2 -> heads), everything in VMEM.
# ----------------------------------------------------------------------------
def _fused_forward_kernel(x0_ref, lblk_ref, wg1f_ref, bias1_ref,
                          wg2_hbm_ref, bias2_ref, headm_ref, headb_ref,
                          o_ref, wg2_vmem, wg2_sem,
                          *, n_hops, eps, neg_slope):
    f32 = jnp.float32
    bf16 = jnp.bfloat16

    # Kick off the block-2 weight DMA immediately so it overlaps BN + block-1.
    wg2_cp = pltpu.make_async_copy(wg2_hbm_ref, wg2_vmem, wg2_sem)
    wg2_cp.start()

    # --- BatchNorm2d(1, affine=False), training-mode (batch) statistics -----
    x = x0_ref[...]                                      # [BN, T] f32
    cnt = x.shape[0] * x.shape[1]
    mean = jnp.sum(x) / cnt
    var = jnp.sum(jnp.square(x - mean)) / cnt
    xn = (x - mean) * lax.rsqrt(var + eps)

    def leaky(y):                                        # leaky_relu (VPU)
        return jnp.where(y >= 0.0, y, neg_slope * y)

    def gather_hops(h):
        # [h, L1 h, ..., L_{K-1} h] concatenated along lanes, bf16 operands.
        hb = h.astype(bf16)
        hops = [hb]
        for k in range(n_hops):
            hops.append(
                jnp.dot(lblk_ref[k], hb, preferred_element_type=f32).astype(bf16))
        return jnp.concatenate(hops, axis=1)

    # --- block 1: 1x1 conv folded into wg1f / bias1 -> one wide-K MXU dot ---
    g1 = gather_hops(xn)                                 # [BN, K*T] bf16
    h = leaky(jnp.dot(g1, wg1f_ref[...], preferred_element_type=f32)
              + bias1_ref[...])                          # [BN, CT] f32

    # --- block 2: wait for its folded weights, then the same pattern --------
    wg2_cp.wait()
    g2 = gather_hops(h)                                  # [BN, K*CT] bf16
    h = leaky(jnp.dot(g2, wg2_vmem[...], preferred_element_type=f32)
              + bias2_ref[...])                          # [BN, CT] f32

    # --- output heads as one lane-dense MXU matmul (conv1 t<12 + conv2) -----
    out = jnp.dot(h.astype(bf16), headm_ref[...],
                  preferred_element_type=f32) + headb_ref[...]
    o_ref[...] = out.astype(o_ref.dtype)                 # [BN, 128]


def _full_spec(shape):
    # Whole-array block (block_shape == array shape) at grid point 0.
    return pl.BlockSpec(shape, lambda *_: (0,) * len(shape))


def _fused_forward(x0, lblk, wg1f, bias1, wg2f, bias2, headm, headb, *, n_hops):
    bn_rows = x0.shape[0]
    pad_cols = headm.shape[1]
    kernel = functools.partial(_fused_forward_kernel, n_hops=n_hops,
                               eps=1e-5, neg_slope=0.01)
    in_specs = [_full_spec(x0.shape), _full_spec(lblk.shape),
                _full_spec(wg1f.shape), _full_spec(bias1.shape),
                pl.BlockSpec(memory_space=pl.ANY),        # wg2f stays in HBM
                _full_spec(bias2.shape), _full_spec(headm.shape),
                _full_spec(headb.shape)]
    return pl.pallas_call(
        kernel,
        out_shape=jax.ShapeDtypeStruct((bn_rows, pad_cols), jnp.float32),
        grid=(1,),
        in_specs=in_specs,
        out_specs=_full_spec((bn_rows, pad_cols)),
        scratch_shapes=[pltpu.VMEM(wg2f.shape, wg2f.dtype),
                        pltpu.SemaphoreType.DMA],
        compiler_params=pltpu.CompilerParams(vmem_limit_bytes=32 * 1024 * 1024),
    )(x0, lblk, wg1f, bias1, wg2f, bias2, headm, headb)


# ----------------------------------------------------------------------------
# Forward wrapper: tiny jnp prep (weight folding, Chebyshev recursion) + one
# fused Pallas kernel.
# ----------------------------------------------------------------------------
def activate_graphsage_forward(x_r, supports, params, *, K):
    assert K >= 2, "Chebyshev order K must be >= 2"
    B, _, N, T = x_r.shape
    W1, b1, Wg1, bg1 = params["block1"]
    W2, b2, Wg2, bg2 = params["block2"]
    c_out = W1.shape[0]
    assert W1.shape[1] == 1, "forward uses a single input channel (Cin == 1)"
    assert T >= 24, "output heads slice time steps 0:12 and 12:24"
    CT = c_out * T
    BN = B * N
    P = 128                       # lane-dense padded head / output width
    f32, bf16 = jnp.float32, jnp.bfloat16

    # A1 = supports + diag_embed(h); ST_BLOCK_1 hands `supports` back => d_adj.
    A1 = supports.astype(f32) + jnp.diag(params["h"].astype(f32))

    # Chebyshev polynomials of A1 (hop 0 = I applied implicitly in-kernel),
    # block-diagonalized over batch so each hop aggregation is one matmul.
    Ls = [jnp.eye(N, dtype=f32), A1]
    for _ in range(2, K):
        Ls.append(2.0 * (A1 @ Ls[-1]) - Ls[-2])
    eye_b = jnp.eye(B, dtype=f32)
    lblk_f32 = jnp.stack([jnp.kron(eye_b, L) for L in Ls[1:K]])   # [K-1,BN,BN]
    lblk = lblk_f32.astype(bf16)

    # Row sums of each hop operator (hop 0 = identity -> 1) for bias folding.
    rs = jnp.concatenate(
        [jnp.ones((BN, 1), f32), jnp.sum(lblk_f32, axis=2).T], axis=1)  # [BN,K]

    # ---- block 1: fold the Cin=1 1x1 conv (W1, b1) into the gcn mix --------
    wg1t = Wg1.T.reshape(K, c_out, T, CT)                          # f32
    wg1f = jnp.einsum('kctj,c->ktj', wg1t, W1[:, 0]).reshape(K * T, CT).astype(bf16)
    bk1 = jnp.einsum('kctj,c->kj', wg1t, b1)                       # [K, CT]
    bias1 = rs @ bk1 + bg1.reshape(1, CT)                          # [BN, CT]

    # ---- block 2: fold the c_out->c_out 1x1 conv (W2, b2) into the gcn mix -
    m2 = jnp.kron(W2.T, jnp.eye(T, dtype=f32))                     # [CT, CT]
    wg2t = Wg2.T.reshape(K, CT, CT)
    wg2f = jnp.einsum('ij,kjl->kil', m2, wg2t).reshape(K * CT, CT).astype(bf16)
    b2_rep = jnp.repeat(b2, T)                                     # [CT]
    bk2 = jnp.einsum('i,kij->kj', b2_rep, wg2t)                    # [K, CT]
    bias2 = rs @ bk2 + bg2.reshape(1, CT)                          # [BN, CT]

    # ---- output heads folded into one lane-dense [CT, 128] matrix ----------
    cw1 = params["conv1_w"].reshape(c_out)
    cw2 = params["conv2_w"].reshape(c_out)
    t_idx = jnp.arange(T)
    j_idx = jnp.arange(P)
    sel1 = ((t_idx[:, None] == j_idx[None, :]) & (j_idx[None, :] < 12)).astype(f32)
    sel2 = ((t_idx[:, None] == (j_idx[None, :] + 12)) & (j_idx[None, :] < 12)).astype(f32)
    headm = (cw1[:, None, None] * sel1[None]
             + cw2[:, None, None] * sel2[None]).reshape(CT, P).astype(bf16)
    headb = jnp.where(j_idx < 12,
                      params["conv1_b"][0] + params["conv2_b"][0],
                      0.0).astype(f32).reshape(1, P)

    # Channel 0 of x_r, un-tiled (the 1x1 conv scale lives in wg1f now).
    x0 = x_r[:, 0, :, :].reshape(BN, T).astype(f32)

    out_pad = _fused_forward(x0, lblk, wg1f, bias1, wg2f, bias2, headm, headb,
                             n_hops=K - 1)
    out = out_pad[:, :12].reshape(B, N, 12)
    return out, A1, A1            # (x, d_adj, A1)


# ----------------------------------------------------------------------------
# Deterministic parameter init (PyTorch-style uniform bounds)
# ----------------------------------------------------------------------------
def init_params(key, c_in, c_out, num_nodes, recent, K):
    CT = c_out * recent
    ks = jax.random.split(key, 13)

    def u(k, shape, fan_in):
        bound = 1.0 / math.sqrt(fan_in)
        return jax.random.uniform(k, shape, jnp.float32, -bound, bound)

    block1 = (u(ks[0], (c_out, c_in), c_in), u(ks[1], (c_out,), c_in),
              u(ks[2], (CT, K * CT), K * CT), u(ks[3], (CT,), K * CT))
    block2 = (u(ks[4], (c_out, c_out), c_out), u(ks[5], (c_out,), c_out),
              u(ks[6], (CT, K * CT), K * CT), u(ks[7], (CT,), K * CT))
    return {
        "block1": block1,
        "block2": block2,
        "conv1_w": u(ks[8], (1, c_out), c_out),
        "conv1_b": u(ks[9], (1,), c_out),
        "conv2_w": u(ks[10], (1, c_out), c_out),
        "conv2_b": u(ks[11], (1,), c_out),
        "h": jax.random.uniform(ks[12], (num_nodes,), jnp.float32, 0.0, 1e-14),
    }


if __name__ == "__main__":
    B, c_in, c_out, num_nodes, recent, K, Kt = 2, 1, 8, 16, 24, 3, 3

    key = jax.random.PRNGKey(0)
    kx, ksup, kp = jax.random.split(key, 3)
    # x_r carries extra raw channels; forward only uses channel 0.
    x_r = jax.random.normal(kx, (B, 3, num_nodes, recent), jnp.float32)
    supports = jax.random.uniform(ksup, (num_nodes, num_nodes), jnp.float32)
    supports = 0.5 * (supports + supports.T)

    params = init_params(kp, c_in, c_out, num_nodes, recent, K)

    fwd = jax.jit(functools.partial(activate_graphsage_forward, K=K))
    out, d_adj, A1 = fwd(x_r, supports, params)
    jax.block_until_ready((out, d_adj, A1))

    assert out.shape == (B, num_nodes, 12)
    assert d_adj.shape == (num_nodes, num_nodes)
    assert A1.shape == (num_nodes, num_nodes)
    print("KERNEL_OK")
</pallas_src>

<mosaic_0001>
module attributes {stable_mosaic.version = 11 : i64} {
  func.func @_fused_forward_kernel(%arg0: i32, %arg1: memref<32x24xf32, #tpu.memory_space<vmem>>, %arg2: memref<2x32x32xbf16, #tpu.memory_space<vmem>>, %arg3: memref<72x192xbf16, #tpu.memory_space<vmem>>, %arg4: memref<32x192xf32, #tpu.memory_space<vmem>>, %arg5: memref<576x192xbf16, #tpu.memory_space<any>>, %arg6: memref<32x192xf32, #tpu.memory_space<vmem>>, %arg7: memref<192x128xbf16, #tpu.memory_space<vmem>>, %arg8: memref<1x128xf32, #tpu.memory_space<vmem>>, %arg9: memref<32x128xf32, #tpu.memory_space<vmem>>, %arg10: memref<576x192xbf16, #tpu.memory_space<vmem>>, %arg11: memref<!tpu.dma_semaphore, #tpu.memory_space<semaphore_mem>>) attributes {dimension_semantics = [#tpu.dimension_semantics<arbitrary>], iteration_bounds = array<i64: 1>, scalar_prefetch = 0 : i64, scratch_operands = 2 : i64, tpu.core_type = #tpu.core_type<tc>, window_params = [{pipeline_mode = #tpu.pipeline_mode<synchronous>, transform_indices = @transform_0, window_bounds = array<i64: 32, 24>}, {pipeline_mode = #tpu.pipeline_mode<synchronous>, transform_indices = @transform_1, window_bounds = array<i64: 2, 32, 32>}, {pipeline_mode = #tpu.pipeline_mode<synchronous>, transform_indices = @transform_2, window_bounds = array<i64: 72, 192>}, {pipeline_mode = #tpu.pipeline_mode<synchronous>, transform_indices = @transform_3, window_bounds = array<i64: 32, 192>}, {}, {pipeline_mode = #tpu.pipeline_mode<synchronous>, transform_indices = @transform_5, window_bounds = array<i64: 32, 192>}, {pipeline_mode = #tpu.pipeline_mode<synchronous>, transform_indices = @transform_6, window_bounds = array<i64: 192, 128>}, {pipeline_mode = #tpu.pipeline_mode<synchronous>, transform_indices = @transform_7, window_bounds = array<i64: 1, 128>}, {pipeline_mode = #tpu.pipeline_mode<synchronous>, transform_indices = @transform_8, window_bounds = array<i64: 32, 128>}]} {
    tpu.enqueue_dma source(%arg5 : memref<576x192xbf16, #tpu.memory_space<any>>) target(%arg10 : memref<576x192xbf16, #tpu.memory_space<vmem>>) target_semaphore(%arg11 : memref<!tpu.dma_semaphore, #tpu.memory_space<semaphore_mem>>)
    %c0 = arith.constant 0 : index
    %c0_0 = arith.constant 0 : index
    %0 = vector.load %arg1[%c0, %c0_0] : memref<32x24xf32, #tpu.memory_space<vmem>>, vector<32x24xf32>
    %1 = vector.shape_cast %0 : vector<32x24xf32> to vector<1x32x24xf32>
    %cst = arith.constant dense<0.000000e+00> : vector<1xf32>
    %2 = vector.multi_reduction <add>, %1, %cst [1, 2] : vector<1x32x24xf32> to vector<1xf32>
    %3 = vector.shape_cast %2 : vector<1xf32> to vector<1x1x1xf32>
    %4 = vector.extract %3[0, 0, 0] : f32 from vector<1x1x1xf32>
    %cst_1 = arith.constant 7.680000e+02 : f32
    %5 = arith.divf %4, %cst_1 : f32
    %6 = vector.broadcast %5 : f32 to vector<32x24xf32>
    %7 = arith.subf %0, %6 : vector<32x24xf32>
    %8 = arith.mulf %7, %7 : vector<32x24xf32>
    %9 = vector.shape_cast %8 : vector<32x24xf32> to vector<1x32x24xf32>
    %cst_2 = arith.constant dense<0.000000e+00> : vector<1xf32>
    %10 = vector.multi_reduction <add>, %9, %cst_2 [1, 2] : vector<1x32x24xf32> to vector<1xf32>
    %11 = vector.shape_cast %10 : vector<1xf32> to vector<1x1x1xf32>
    %12 = vector.extract %11[0, 0, 0] : f32 from vector<1x1x1xf32>
    %cst_3 = arith.constant 7.680000e+02 : f32
    %13 = arith.divf %12, %cst_3 : f32
    %14 = vector.broadcast %5 : f32 to vector<32x24xf32>
    %15 = arith.subf %0, %14 : vector<32x24xf32>
    %cst_4 = arith.constant 9.99999974E-6 : f32
    %16 = arith.addf %13, %cst_4 : f32
    %17 = math.rsqrt %16 : f32
    %18 = vector.broadcast %17 : f32 to vector<32x24xf32>
    %19 = arith.mulf %15, %18 : vector<32x24xf32>
    %20 = arith.truncf %19 : vector<32x24xf32> to vector<32x24xbf16>
    %c0_5 = arith.constant 0 : index
    %c0_6 = arith.constant 0 : index
    %c0_7 = arith.constant 0 : index
    %21 = vector.load %arg2[%c0_5, %c0_6, %c0_7] : memref<2x32x32xbf16, #tpu.memory_space<vmem>>, vector<1x32x32xbf16>
    %22 = vector.shape_cast %21 : vector<1x32x32xbf16> to vector<32x32xbf16>
    %cst_8 = arith.constant dense<0.000000e+00> : vector<32x24xf32>
    %23 = tpu.matmul %22, %20, %cst_8 {dimension_numbers = #tpu.dot_dimension_numbers<[1], [0], [0], [1], [0, 0, 1, 1], [], []>} : vector<32x32xbf16>, vector<32x24xbf16>, vector<32x24xf32> -> vector<32x24xf32>
    %24 = arith.truncf %23 : vector<32x24xf32> to vector<32x24xbf16>
    %c1 = arith.constant 1 : index
    %c0_9 = arith.constant 0 : index
    %c0_10 = arith.constant 0 : index
    %25 = vector.load %arg2[%c1, %c0_9, %c0_10] : memref<2x32x32xbf16, #tpu.memory_space<vmem>>, vector<1x32x32xbf16>
    %26 = vector.shape_cast %25 : vector<1x32x32xbf16> to vector<32x32xbf16>
    %cst_11 = arith.constant dense<0.000000e+00> : vector<32x24xf32>
    %27 = tpu.matmul %26, %20, %cst_11 {dimension_numbers = #tpu.dot_dimension_numbers<[1], [0], [0], [1], [0, 0, 1, 1], [], []>} : vector<32x32xbf16>, vector<32x24xbf16>, vector<32x24xf32> -> vector<32x24xf32>
    %28 = arith.truncf %27 : vector<32x24xf32> to vector<32x24xbf16>
    %29 = tpu.concatenate %20, %24, %28 in 1 : vector<32x24xbf16>, vector<32x24xbf16>, vector<32x24xbf16> -> vector<32x72xbf16>
    %c0_12 = arith.constant 0 : index
    %c0_13 = arith.constant 0 : index
    %30 = vector.load %arg3[%c0_12, %c0_13] : memref<72x192xbf16, #tpu.memory_space<vmem>>, vector<72x192xbf16>
    %cst_14 = arith.constant dense<0.000000e+00> : vector<32x192xf32>
    %31 = tpu.matmul %29, %30, %cst_14 {dimension_numbers = #tpu.dot_dimension_numbers<[1], [0], [0], [1], [0, 0, 1, 1], [], []>} : vector<32x72xbf16>, vector<72x192xbf16>, vector<32x192xf32> -> vector<32x192xf32>
    %c0_15 = arith.constant 0 : index
    %c0_16 = arith.constant 0 : index
    %32 = vector.load %arg4[%c0_15, %c0_16] : memref<32x192xf32, #tpu.memory_space<vmem>>, vector<32x192xf32>
    %33 = arith.addf %31, %32 : vector<32x192xf32>
    %cst_17 = arith.constant 0.000000e+00 : f32
    %34 = vector.broadcast %cst_17 : f32 to vector<32x192xf32>
    %35 = arith.cmpf oge, %33, %34 : vector<32x192xf32>
    %cst_18 = arith.constant 0.00999999977 : f32
    %36 = vector.broadcast %cst_18 : f32 to vector<32x192xf32>
    %37 = arith.mulf %36, %33 : vector<32x192xf32>
    %38 = arith.select %35, %33, %37 : vector<32x192xi1>, vector<32x192xf32>
    tpu.wait_dma2 semaphore(%arg11 : memref<!tpu.dma_semaphore, #tpu.memory_space<semaphore_mem>>) src(%arg5 : memref<576x192xbf16, #tpu.memory_space<any>>) dst(%arg10 : memref<576x192xbf16, #tpu.memory_space<vmem>>)
    %39 = arith.truncf %38 : vector<32x192xf32> to vector<32x192xbf16>
    %c0_19 = arith.constant 0 : index
    %c0_20 = arith.constant 0 : index
    %c0_21 = arith.constant 0 : index
    %40 = vector.load %arg2[%c0_19, %c0_20, %c0_21] : memref<2x32x32xbf16, #tpu.memory_space<vmem>>, vector<1x32x32xbf16>
    %41 = vector.shape_cast %40 : vector<1x32x32xbf16> to vector<32x32xbf16>
    %cst_22 = arith.constant dense<0.000000e+00> : vector<32x192xf32>
    %42 = tpu.matmul %41, %39, %cst_22 {dimension_numbers = #tpu.dot_dimension_numbers<[1], [0], [0], [1], [0, 0, 1, 1], [], []>} : vector<32x32xbf16>, vector<32x192xbf16>, vector<32x192xf32> -> vector<32x192xf32>
    %43 = arith.truncf %42 : vector<32x192xf32> to vector<32x192xbf16>
    %c1_23 = arith.constant 1 : index
    %c0_24 = arith.constant 0 : index
    %c0_25 = arith.constant 0 : index
    %44 = vector.load %arg2[%c1_23, %c0_24, %c0_25] : memref<2x32x32xbf16, #tpu.memory_space<vmem>>, vector<1x32x32xbf16>
    %45 = vector.shape_cast %44 : vector<1x32x32xbf16> to vector<32x32xbf16>
    %cst_26 = arith.constant dense<0.000000e+00> : vector<32x192xf32>
    %46 = tpu.matmul %45, %39, %cst_26 {dimension_numbers = #tpu.dot_dimension_numbers<[1], [0], [0], [1], [0, 0, 1, 1], [], []>} : vector<32x32xbf16>, vector<32x192xbf16>, vector<32x192xf32> -> vector<32x192xf32>
    %47 = arith.truncf %46 : vector<32x192xf32> to vector<32x192xbf16>
    %48 = tpu.concatenate %39, %43, %47 in 1 : vector<32x192xbf16>, vector<32x192xbf16>, vector<32x192xbf16> -> vector<32x576xbf16>
    %c0_27 = arith.constant 0 : index
    %c0_28 = arith.constant 0 : index
    %49 = vector.load %arg10[%c0_27, %c0_28] : memref<576x192xbf16, #tpu.memory_space<vmem>>, vector<576x192xbf16>
    %cst_29 = arith.constant dense<0.000000e+00> : vector<32x192xf32>
    %50 = tpu.matmul %48, %49, %cst_29 {dimension_numbers = #tpu.dot_dimension_numbers<[1], [0], [0], [1], [0, 0, 1, 1], [], []>} : vector<32x576xbf16>, vector<576x192xbf16>, vector<32x192xf32> -> vector<32x192xf32>
    %c0_30 = arith.constant 0 : index
    %c0_31 = arith.constant 0 : index
    %51 = vector.load %arg6[%c0_30, %c0_31] : memref<32x192xf32, #tpu.memory_space<vmem>>, vector<32x192xf32>
    %52 = arith.addf %50, %51 : vector<32x192xf32>
    %cst_32 = arith.constant 0.000000e+00 : f32
    %53 = vector.broadcast %cst_32 : f32 to vector<32x192xf32>
    %54 = arith.cmpf oge, %52, %53 : vector<32x192xf32>
    %cst_33 = arith.constant 0.00999999977 : f32
    %55 = vector.broadcast %cst_33 : f32 to vector<32x192xf32>
    %56 = arith.mulf %55, %52 : vector<32x192xf32>
    %57 = arith.select %54, %52, %56 : vector<32x192xi1>, vector<32x192xf32>
    %58 = arith.truncf %57 : vector<32x192xf32> to vector<32x192xbf16>
    %c0_34 = arith.constant 0 : index
    %c0_35 = arith.constant 0 : index
    %59 = vector.load %arg7[%c0_34, %c0_35] : memref<192x128xbf16, #tpu.memory_space<vmem>>, vector<192x128xbf16>
    %cst_36 = arith.constant dense<0.000000e+00> : vector<32x128xf32>
    %60 = tpu.matmul %58, %59, %cst_36 {dimension_numbers = #tpu.dot_dimension_numbers<[1], [0], [0], [1], [0, 0, 1, 1], [], []>} : vector<32x192xbf16>, vector<192x128xbf16>, vector<32x128xf32> -> vector<32x128xf32>
    %c0_37 = arith.constant 0 : index
    %c0_38 = arith.constant 0 : index
    %61 = vector.load %arg8[%c0_37, %c0_38] : memref<1x128xf32, #tpu.memory_space<vmem>>, vector<1x128xf32>
    %62 = vector.broadcast %61 : vector<1x128xf32> to vector<32x128xf32>
    %63 = arith.addf %60, %62 : vector<32x128xf32>
    %c0_39 = arith.constant 0 : index
    %c0_40 = arith.constant 0 : index
    %64 = vector.load %arg9[%c0_39, %c0_40] : memref<32x128xf32, #tpu.memory_space<vmem>>, vector<32x128xf32>
    tpu.vector_store %arg9[%c0_39, %c0_40], %63 {strides = array<i32>} : memref<32x128xf32, #tpu.memory_space<vmem>>, vector<32x128xf32>,
    return
  }
  func.func @transform_0(%arg0: i32) -> (i32, i32) {
    %c0_i32 = arith.constant 0 : i32
    %c0_i32_0 = arith.constant 0 : i32
    %c0_i32_1 = arith.constant 0 : i32
    return %c0_i32, %c0_i32_0 : i32, i32
  }
  func.func @transform_1(%arg0: i32) -> (i32, i32, i32) {
    %c0_i32 = arith.constant 0 : i32
    %c0_i32_0 = arith.constant 0 : i32
    %c0_i32_1 = arith.constant 0 : i32
    %c0_i32_2 = arith.constant 0 : i32
    return %c0_i32, %c0_i32_0, %c0_i32_1 : i32, i32, i32
  }
  func.func @transform_2(%arg0: i32) -> (i32, i32) {
    %c0_i32 = arith.constant 0 : i32
    %c0_i32_0 = arith.constant 0 : i32
    %c0_i32_1 = arith.constant 0 : i32
    return %c0_i32, %c0_i32_0 : i32, i32
  }
  func.func @transform_3(%arg0: i32) -> (i32, i32) {
    %c0_i32 = arith.constant 0 : i32
    %c0_i32_0 = arith.constant 0 : i32
    %c0_i32_1 = arith.constant 0 : i32
    return %c0_i32, %c0_i32_0 : i32, i32
  }
  func.func @transform_5(%arg0: i32) -> (i32, i32) {
    %c0_i32 = arith.constant 0 : i32
    %c0_i32_0 = arith.constant 0 : i32
    %c0_i32_1 = arith.constant 0 : i32
    return %c0_i32, %c0_i32_0 : i32, i32
  }
  func.func @transform_6(%arg0: i32) -> (i32, i32) {
    %c0_i32 = arith.constant 0 : i32
    %c0_i32_0 = arith.constant 0 : i32
    %c0_i32_1 = arith.constant 0 : i32
    return %c0_i32, %c0_i32_0 : i32, i32
  }
  func.func @transform_7(%arg0: i32) -> (i32, i32) {
    %c0_i32 = arith.constant 0 : i32
    %c0_i32_0 = arith.constant 0 : i32
    %c0_i32_1 = arith.constant 0 : i32
    return %c0_i32, %c0_i32_0 : i32, i32
  }
  func.func @transform_8(%arg0: i32) -> (i32, i32) {
    %c0_i32 = arith.constant 0 : i32
    %c0_i32_0 = arith.constant 0 : i32
    %c0_i32_1 = arith.constant 0 : i32
    return %c0_i32, %c0_i32_0 : i32, i32
  }
}

</mosaic_0001>

<llo_original>
// kernel: activate_graphsage_forward.1
$region0: #{activate_graphsage_forward.1}
  #allocation0 [shape = 'u32[]', space=smem, size = 0x4, offset = 0x4, fixed_abs, tag = 'smem constant byte address 0x4 - core index']
  #allocation1 [shape = 'u32[72,128]{1,0:T(1,128)}', space=vmem, size = 0x9000, scoped, tag = 'internal scratch']
  #allocation2 [shape = 'bf16[576,192]{1,0:T(8,128)(2,1)}', space=vmem, size = 0x48000, scoped, tag = 'scratch operand']
  #allocation3 [shape = 's32[1]{0}', space=sflag, size = 0x4, scoped, tag = 'scratch operand']
  #allocation4 [shape = 's32[]', space=sflag, size = 0x4, offset = 0, fixed_abs, tag = 'sflag constant byte address 0x0 - dummy sync flag']
  %s0 = inlined_call_operand.vmem [shape: f32[32,24], index: 0, kind: input, shape index: {}]
  %s1 = inlined_call_operand.vmem [shape: bf16[2,32,32], index: 1, kind: input, shape index: {}]
  %s2 = inlined_call_operand.vmem [shape: bf16[72,192], index: 2, kind: input, shape index: {}]
  %s3 = inlined_call_operand.vmem [shape: f32[32,192], index: 3, kind: input, shape index: {}]
  %s4 = inlined_call_operand.vmem [shape: bf16[576,192], index: 4, kind: input, shape index: {}]
  %s5 = inlined_call_operand.vmem [shape: f32[32,192], index: 5, kind: input, shape index: {}]
  %s6 = inlined_call_operand.vmem [shape: bf16[192,128], index: 6, kind: input, shape index: {}]
  %s7 = inlined_call_operand.vmem [shape: f32[1,128], index: 7, kind: input, shape index: {}]
  %s8 = inlined_call_operand.vmem [shape: f32[32,128], index: 8, kind: output, shape index: {}]
  %s9 = sld [smem:[#allocation0]]
  $region57: #{activate_graphsage_forward.1} parent=0
    _
  %s11 = ssub.s32 1, %s9
  %s12 = scalar_select 0, %s11, %s9
  // Predicated region
  $region2: #{activate_graphsage_forward.1} parent=0 // pred_check
    _
  $region3: #{activate_graphsage_forward.1} parent=0 // pred_check_branch
    %14 = sbr.rel (0) target = $region5
  $region4: #{activate_graphsage_forward.1} parent=0 // pred_region
    _
  $region5: #{activate_graphsage_forward.1} parent=0 // pred_fallthru
    _
  // Predicated region
  $region6: #{activate_graphsage_forward.1} parent=0 // pred_check
    _
  $region7: #{activate_graphsage_forward.1} parent=0 // pred_check_branch
    %16 = sbr.rel (0) target = $region9
  $region8: #{activate_graphsage_forward.1} parent=0 // pred_region
    _
  $region9: #{activate_graphsage_forward.1} parent=0 // pred_fallthru
    _
  // Predicated region
  $region10: #{activate_graphsage_forward.1} parent=0 // pred_check
    _
  $region11: #{activate_graphsage_forward.1} parent=0 // pred_check_branch
    %18 = sbr.rel (0) target = $region13
  $region12: #{activate_graphsage_forward.1} parent=0 // pred_region
    _
  $region13: #{activate_graphsage_forward.1} parent=0 // pred_fallthru
    _
  // Predicated region
  $region14: #{activate_graphsage_forward.1} parent=0 // pred_check
    _
  $region15: #{activate_graphsage_forward.1} parent=0 // pred_check_branch
    %20 = sbr.rel (0) target = $region17
  $region16: #{activate_graphsage_forward.1} parent=0 // pred_region
    _
  $region17: #{activate_graphsage_forward.1} parent=0 // pred_fallthru
    _
  // Predicated region
  $region18: #{activate_graphsage_forward.1} parent=0 // pred_check
    _
  $region19: #{activate_graphsage_forward.1} parent=0 // pred_check_branch
    %22 = sbr.rel (0) target = $region21
  $region20: #{activate_graphsage_forward.1} parent=0 // pred_region
    _
  $region21: #{activate_graphsage_forward.1} parent=0 // pred_fallthru
    _
  // Predicated region
  $region22: #{activate_graphsage_forward.1} parent=0 // pred_check
    _
  $region23: #{activate_graphsage_forward.1} parent=0 // pred_check_branch
    %24 = sbr.rel (0) target = $region25
  $region24: #{activate_graphsage_forward.1} parent=0 // pred_region
    _
  $region25: #{activate_graphsage_forward.1} parent=0 // pred_fallthru
    _
  // Predicated region
  $region26: #{activate_graphsage_forward.1} parent=0 // pred_check
    _
  $region27: #{activate_graphsage_forward.1} parent=0 // pred_check_branch
    %26 = sbr.rel (0) target = $region29
  $region28: #{activate_graphsage_forward.1} parent=0 // pred_region
    _
  $region29: #{activate_graphsage_forward.1} parent=0 // pred_fallthru
    _
  // Predicated region
  $region30: #{activate_graphsage_forward.1} parent=0 // pred_check
    _
  $region31: #{activate_graphsage_forward.1} parent=0 // pred_check_branch
    %29 = sbr.rel (0) target = $region33
  $region32: #{activate_graphsage_forward.1} parent=0 // pred_region
    loop: start=0, step=1, limit=1
    $region34: #{activate_graphsage_forward.1} parent=32 // loop_pre_header
      _
    $region35: #{activate_graphsage_forward.1} parent=32 // loop_header
      %s31 = sphi 0, %s35
      %p32 = scmp.ge.s32.totalorder %s31, 1
      %s36 = sphi %s4, %s4
      %s37 = sphi [#allocation2], [#allocation2]
    $region36: #{activate_graphsage_forward.1} parent=32 // loop_header_branch
      %34 = sbr.rel (%p32) target = $region40
    $region37: #{activate_graphsage_forward.1} parent=32 // loop_body
      %v38 = vld [vmem:[%s36] sm:$0xff]
      %39 = vst [vmem:[%s37] sm:$0xff] %v38
      %v40 = vld [vmem:[%s36 + $0x8] sm:$0xff]
      %41 = vst [vmem:[%s37 + $0x8] sm:$0xff] %v40
      %v42 = vld [vmem:[%s36 + $0x10] sm:$0xff]
      %43 = vst [vmem:[%s37 + $0x10] sm:$0xff] %v42
      %v44 = vld [vmem:[%s36 + $0x18] sm:$0xff]
      %45 = vst [vmem:[%s37 + $0x18] sm:$0xff] %v44
      %v46 = vld [vmem:[%s36 + $0x20] sm:$0xff]
      %47 = vst [vmem:[%s37 + $0x20] sm:$0xff] %v46
      %v48 = vld [vmem:[%s36 + $0x28] sm:$0xff]
      %49 = vst [vmem:[%s37 + $0x28] sm:$0xff] %v48
      %v50 = vld [vmem:[%s36 + $0x30] sm:$0xff]
      %51 = vst [vmem:[%s37 + $0x30] sm:$0xff] %v50
      %v52 = vld [vmem:[%s36 + $0x38] sm:$0xff]
      %53 = vst [vmem:[%s37 + $0x38] sm:$0xff] %v52
      %v54 = vld [vmem:[%s36 + $0x40] sm:$0xff]
      %55 = vst [vmem:[%s37 + $0x40] sm:$0xff] %v54
      %v56 = vld [vmem:[%s36 + $0x48] sm:$0xff]
      %57 = vst [vmem:[%s37 + $0x48] sm:$0xff] %v56
      %v58 = vld [vmem:[%s36 + $0x50] sm:$0xff]
      %59 = vst [vmem:[%s37 + $0x50] sm:$0xff] %v58
      %v60 = vld [vmem:[%s36 + $0x58] sm:$0xff]
      %61 = vst [vmem:[%s37 + $0x58] sm:$0xff] %v60
      %v62 = vld [vmem:[%s36 + $0x60] sm:$0xff]
      %63 = vst [vmem:[%s37 + $0x60] sm:$0xff] %v62
      %v64 = vld [vmem:[%s36 + $0x68] sm:$0xff]
      %65 = vst [vmem:[%s37 + $0x68] sm:$0xff] %v64
      %v66 = vld [vmem:[%s36 + $0x70] sm:$0xff]
      %67 = vst [vmem:[%s37 + $0x70] sm:$0xff] %v66
      %v68 = vld [vmem:[%s36 + $0x78] sm:$0xff]
      %69 = vst [vmem:[%s37 + $0x78] sm:$0xff] %v68
      %v70 = vld [vmem:[%s36 + $0x80] sm:$0xff]
      %71 = vst [vmem:[%s37 + $0x80] sm:$0xff] %v70
      %v72 = vld [vmem:[%s36 + $0x88] sm:$0xff]
      %73 = vst [vmem:[%s37 + $0x88] sm:$0xff] %v72
      %v74 = vld [vmem:[%s36 + $0x90] sm:$0xff]
      %75 = vst [vmem:[%s37 + $0x90] sm:$0xff] %v74
      %v76 = vld [vmem:[%s36 + $0x98] sm:$0xff]
      %77 = vst [vmem:[%s37 + $0x98] sm:$0xff] %v76
      %v78 = vld [vmem:[%s36 + $0xa0] sm:$0xff]
      %79 = vst [vmem:[%s37 + $0xa0] sm:$0xff] %v78
      %v80 = vld [vmem:[%s36 + $0xa8] sm:$0xff]
      %81 = vst [vmem:[%s37 + $0xa8] sm:$0xff] %v80
      %v82 = vld [vmem:[%s36 + $0xb0] sm:$0xff]
      %83 = vst [vmem:[%s37 + $0xb0] sm:$0xff] %v82
      %v84 = vld [vmem:[%s36 + $0xb8] sm:$0xff]
      %85 = vst [vmem:[%s37 + $0xb8] sm:$0xff] %v84
      %v86 = vld [vmem:[%s36 + $0xc0] sm:$0xff]
      %87 = vst [vmem:[%s37 + $0xc0] sm:$0xff] %v86
      %v88 = vld [vmem:[%s36 + $0xc8] sm:$0xff]
      %89 = vst [vmem:[%s37 + $0xc8] sm:$0xff] %v88
      %v90 = vld [vmem:[%s36 + $0xd0] sm:$0xff]
      %91 = vst [vmem:[%s37 + $0xd0] sm:$0xff] %v90
      %v92 = vld [vmem:[%s36 + $0xd8] sm:$0xff]
      %93 = vst [vmem:[%s37 + $0xd8] sm:$0xff] %v92
      %v94 = vld [vmem:[%s36 + $0xe0] sm:$0xff]
      %95 = vst [vmem:[%s37 + $0xe0] sm:$0xff] %v94
      %v96 = vld [vmem:[%s36 + $0xe8] sm:$0xff]
      %97 = vst [vmem:[%s37 + $0xe8] sm:$0xff] %v96
      %v98 = vld [vmem:[%s36 + $0xf0] sm:$0xff]
      %99 = vst [vmem:[%s37 + $0xf0] sm:$0xff] %v98
      %v100 = vld [vmem:[%s36 + $0xf8] sm:$0xff]
      %101 = vst [vmem:[%s37 + $0xf8] sm:$0xff] %v100
      %v102 = vld [vmem:[%s36 + $0x100] sm:$0xff]
      %103 = vst [vmem:[%s37 + $0x100] sm:$0xff] %v102
      %v104 = vld [vmem:[%s36 + $0x108] sm:$0xff]
      %105 = vst [vmem:[%s37 + $0x108] sm:$0xff] %v104
      %v106 = vld [vmem:[%s36 + $0x110] sm:$0xff]
      %107 = vst [vmem:[%s37 + $0x110] sm:$0xff] %v106
      %v108 = vld [vmem:[%s36 + $0x118] sm:$0xff]
      %109 = vst [vmem:[%s37 + $0x118] sm:$0xff] %v108
      %v110 = vld [vmem:[%s36 + $0x120] sm:$0xff]
      %111 = vst [vmem:[%s37 + $0x120] sm:$0xff] %v110
      %v112 = vld [vmem:[%s36 + $0x128] sm:$0xff]
      %113 = vst [vmem:[%s37 + $0x128] sm:$0xff] %v112
      %v114 = vld [vmem:[%s36 + $0x130] sm:$0xff]
      %115 = vst [vmem:[%s37 + $0x130] sm:$0xff] %v114
      %v116 = vld [vmem:[%s36 + $0x138] sm:$0xff]
      %117 = vst [vmem:[%s37 + $0x138] sm:$0xff] %v116
      %v118 = vld [vmem:[%s36 + $0x140] sm:$0xff]
      %119 = vst [vmem:[%s37 + $0x140] sm:$0xff] %v118
      %v120 = vld [vmem:[%s36 + $0x148] sm:$0xff]
      %121 = vst [vmem:[%s37 + $0x148] sm:$0xff] %v120
      %v122 = vld [vmem:[%s36 + $0x150] sm:$0xff]
      %123 = vst [vmem:[%s37 + $0x150] sm:$0xff] %v122
      %v124 = vld [vmem:[%s36 + $0x158] sm:$0xff]
      %125 = vst [vmem:[%s37 + $0x158] sm:$0xff] %v124
      %v126 = vld [vmem:[%s36 + $0x160] sm:$0xff]
      %127 = vst [vmem:[%s37 + $0x160] sm:$0xff] %v126
      %v128 = vld [vmem:[%s36 + $0x168] sm:$0xff]
      %129 = vst [vmem:[%s37 + $0x168] sm:$0xff] %v128
      %v130 = vld [vmem:[%s36 + $0x170] sm:$0xff]
      %131 = vst [vmem:[%s37 + $0x170] sm:$0xff] %v130
      %v132 = vld [vmem:[%s36 + $0x178] sm:$0xff]
      %133 = vst [vmem:[%s37 + $0x178] sm:$0xff] %v132
      %v134 = vld [vmem:[%s36 + $0x180] sm:$0xff]
      %135 = vst [vmem:[%s37 + $0x180] sm:$0xff] %v134
      %v136 = vld [vmem:[%s36 + $0x188] sm:$0xff]
      %137 = vst [vmem:[%s37 + $0x188] sm:$0xff] %v136
      %v138 = vld [vmem:[%s36 + $0x190] sm:$0xff]
      %139 = vst [vmem:[%s37 + $0x190] sm:$0xff] %v138
      %v140 = vld [vmem:[%s36 + $0x198] sm:$0xff]
      %141 = vst [vmem:[%s37 + $0x198] sm:$0xff] %v140
      %v142 = vld [vmem:[%s36 + $0x1a0] sm:$0xff]
      %143 = vst [vmem:[%s37 + $0x1a0] sm:$0xff] %v142
      %v144 = vld [vmem:[%s36 + $0x1a8] sm:$0xff]
      %145 = vst [vmem:[%s37 + $0x1a8] sm:$0xff] %v144
      %v146 = vld [vmem:[%s36 + $0x1b0] sm:$0xff]
      %147 = vst [vmem:[%s37 + $0x1b0] sm:$0xff] %v146
      %v148 = vld [vmem:[%s36 + $0x1b8] sm:$0xff]
      %149 = vst [vmem:[%s37 + $0x1b8] sm:$0xff] %v148
      %v150 = vld [vmem:[%s36 + $0x1c0] sm:$0xff]
      %151 = vst [vmem:[%s37 + $0x1c0] sm:$0xff] %v150
      %v152 = vld [vmem:[%s36 + $0x1c8] sm:$0xff]
      %153 = vst [vmem:[%s37 + $0x1c8] sm:$0xff] %v152
      %v154 = vld [vmem:[%s36 + $0x1d0] sm:$0xff]
      %155 = vst [vmem:[%s37 + $0x1d0] sm:$0xff] %v154
      %v156 = vld [vmem:[%s36 + $0x1d8] sm:$0xff]
      %157 = vst [vmem:[%s37 + $0x1d8] sm:$0xff] %v156
      %v158 = vld [vmem:[%s36 + $0x1e0] sm:$0xff]
      %159 = vst [vmem:[%s37 + $0x1e0] sm:$0xff] %v158
      %v160 = vld [vmem:[%s36 + $0x1e8] sm:$0xff]
      %161 = vst [vmem:[%s37 + $0x1e8] sm:$0xff] %v160
      %v162 = vld [vmem:[%s36 + $0x1f0] sm:$0xff]
      %163 = vst [vmem:[%s37 + $0x1f0] sm:$0xff] %v162
      %v164 = vld [vmem:[%s36 + $0x1f8] sm:$0xff]
      %165 = vst [vmem:[%s37 + $0x1f8] sm:$0xff] %v164
      %v166 = vld [vmem:[%s36 + $0x200] sm:$0xff]
      %167 = vst [vmem:[%s37 + $0x200] sm:$0xff] %v166
      %v168 = vld [vmem:[%s36 + $0x208] sm:$0xff]
      %169 = vst [vmem:[%s37 + $0x208] sm:$0xff] %v168
      %v170 = vld [vmem:[%s36 + $0x210] sm:$0xff]
      %171 = vst [vmem:[%s37 + $0x210] sm:$0xff] %v170
      %v172 = vld [vmem:[%s36 + $0x218] sm:$0xff]
      %173 = vst [vmem:[%s37 + $0x218] sm:$0xff] %v172
      %v174 = vld [vmem:[%s36 + $0x220] sm:$0xff]
      %175 = vst [vmem:[%s37 + $0x220] sm:$0xff] %v174
      %v176 = vld [vmem:[%s36 + $0x228] sm:$0xff]
      %177 = vst [vmem:[%s37 + $0x228] sm:$0xff] %v176
      %v178 = vld [vmem:[%s36 + $0x230] sm:$0xff]
      %179 = vst [vmem:[%s37 + $0x230] sm:$0xff] %v178
      %v180 = vld [vmem:[%s36 + $0x238] sm:$0xff]
      %181 = vst [vmem:[%s37 + $0x238] sm:$0xff] %v180
    $region38: #{activate_graphsage_forward.1} parent=32 // loop_footer
      %s35 = sadd.s32 1, %s31
    $region39: #{activate_graphsage_forward.1} parent=32 // loop_footer_branch
      %30 = sbr.rel target = $region35
    $region40: #{activate_graphsage_forward.1} parent=32 // loop_exit
      _
  $region33: #{activate_graphsage_forward.1} parent=0 // pred_fallthru
    _
  // Predicated region
  $region41: #{activate_graphsage_forward.1} parent=0 // pred_check
    _
  $region42: #{activate_graphsage_forward.1} parent=0 // pred_check_branch
    %183 = sbr.rel target = $region44
  $region43: #{activate_graphsage_forward.1} parent=0 // pred_region
    _
  $region44: #{activate_graphsage_forward.1} parent=0 // pred_fallthru
    _
  // Predicated region
  $region45: #{activate_graphsage_forward.1} parent=0 // pred_check
    _
  $region46: #{activate_graphsage_forward.1} parent=0 // pred_check_branch
    %186 = sbr.rel (0) target = $region48
  $region47: #{activate_graphsage_forward.1} parent=0 // pred_region
    %187 = vsyncadd [#allocation3], 9216
  $region48: #{activate_graphsage_forward.1} parent=0 // pred_fallthru
    _
  %v188 = vld [vmem:[%s0] sm:$0xff]
  %v189 = vld [vmem:[%s0 + $0x8] sm:$0xff]
  %v190 = vld [vmem:[%s0 + $0x10] sm:$0xff]
  %v191 = vld [vmem:[%s0 + $0x18] sm:$0xff]
  %vm192 = vcmask 195584
  %v193 = vsel %vm192, %v188, 0.0
  %v194 = vsel %vm192, %v189, 0.0
  %v195 = vadd.f32 %v193, %v194
  %v196 = vsel %vm192, %v190, 0.0
  %v197 = vadd.f32 %v195, %v196
  %v198 = vsel %vm192, %v191, 0.0
  %v199 = vadd.f32 %v197, %v198
  %200 = vadd.xlane.f32.xlu0 %v199
  %v201 = vpop.xlane.xlu0 %200
  %v202 = vrot.slane %v201, 4
  %v203 = vadd.f32 %v201, %v202
  %v204 = vrot.slane %v203, 2
  %v205 = vadd.f32 %v203, %v204
  %v206 = vrot.slane %v205, 1
  %v207 = vadd.f32 %v205, %v206
  %s208 = vtos %v207
  %v209 = vrcp.pop 768.0
  %v210 = vmul.f32 768.0, %v209
  %v211 = vsub.f32 1.0, %v210
  %v212 = vmul.f32 %v209, %v211
  %v213 = vadd.f32 %v209, %v212
  %vm214 = vweird.f32 %v209
  %v215 = vsel %vm214, %v209, %v213
  %s216 = vtos %v215
  %s217 = smul.f32 %s208, %s216
  %v218 = vstv %s217
  %v219 = vsub.f32 %v188, %v218
  %v220 = vsub.f32 %v189, %v218
  %v221 = vsub.f32 %v190, %v218
  %v222 = vsub.f32 %v191, %v218
  %v223 = vmul.f32 %v219, %v219
  %v224 = vmul.f32 %v220, %v220
  %v225 = vmul.f32 %v221, %v221
  %v226 = vmul.f32 %v222, %v222
  %v227 = vsel %vm192, %v223, 0.0
  %v228 = vsel %vm192, %v224, 0.0
  %v229 = vadd.f32 %v227, %v228
  %v230 = vsel %vm192, %v225, 0.0
  %v231 = vadd.f32 %v229, %v230
  %v232 = vsel %vm192, %v226, 0.0
  %v233 = vadd.f32 %v231, %v232
  %234 = vadd.xlane.f32.xlu0 %v233
  %v235 = vpop.xlane.xlu0 %234
  %v236 = vrot.slane %v235, 4
  %v237 = vadd.f32 %v235, %v236
  %v238 = vrot.slane %v237, 2
  %v239 = vadd.f32 %v237, %v238
  %v240 = vrot.slane %v239, 1
  %v241 = vadd.f32 %v239, %v240
  %s242 = vtos %v241
  %v243 = vrcp.pop 768.0
  %v244 = vmul.f32 768.0, %v243
  %v245 = vsub.f32 1.0, %v244
  %v246 = vmul.f32 %v243, %v245
  %v247 = vadd.f32 %v243, %v246
  %vm248 = vweird.f32 %v243
  %v249 = vsel %vm248, %v243, %v247
  %s250 = vtos %v249
  %s251 = smul.f32 %s242, %s250
  %s252 = sadd.f32 %s251, 1e-05
  %v253 = vstv %s252
  %v254 = vrsqrt.pop %v253
  %v255 = vmul.f32 %v254, %v253
  %v256 = vmul.f32 %v255, %v254
  %v257 = vmul.f32 0.5, %v256
  %v258 = vsub.f32 1.5, %v257
  %v259 = vmul.f32 %v254, %v258
  %vm260 = vweird.f32 %v253
  %vm261 = vweird.f32 %v254
  %vm262 = vmor %vm260, %vm261
  %v263 = vsel %vm262, %v254, %v259
  %s264 = vtos %v263
  %v265 = vstv %s264
  %v266 = vmul.f32 %v219, %v265
  %v267 = vmul.f32 %v220, %v265
  %v268 = vmul.f32 %v221, %v265
  %v269 = vmul.f32 %v222, %v265
  %v270 = vpack.c.bf16 %v266, %v266
  %v271 = vpack.c.bf16 %v267, %v267
  %v272 = vpack.c.bf16 %v268, %v268
  %v273 = vpack.c.bf16 %v269, %v269
  %v274 = vld [vmem:[%s1] sm:$0xf]
  %v275 = vld [vmem:[%s1 + $0x4] sm:$0xf]
  %v276 = vld [vmem:[%s1 + $0x8] sm:$0xf]
  %v277 = vld [vmem:[%s1 + $0xc] sm:$0xf]
  %v282 = vunpack.c.l.b16 %v274
  %v283 = vunpack.c.l.b16 %v275
  %v284 = vunpack.c.l.b16 %v276
  %v285 = vunpack.c.l.b16 %v277
  %v286 = vpack.c.b16 %v283, %v282
  %v287 = vpack.c.b16 %v285, %v284
  %v292 = vunpack.c.l.b16 %v270
  %v293 = vunpack.c.l.b16 %v271
  %v294 = vunpack.c.l.b16 %v272
  %v295 = vunpack.c.l.b16 %v273
  %v296 = vpack.c.b16 %v293, %v292
  %v297 = vpack.c.b16 %v295, %v294
  %vm300 = vcmask 261120
  %v302 = vsel %vm300, %v286, 0
  %v305 = vsel %vm300, %v287, 0
  %307 = vmatpush.bf16.msra.mxu0 0
  %308 = vmatpush.bf16.msra.mxu0 0
  %309 = vmatpush.bf16.msra.mxu0 0
  %310 = vmatpush.bf16.msra.mxu0 0
  %311 = vmatpush.bf16.msra.mxu0 0
  %312 = vmatpush.bf16.msra.mxu0 0
  %313 = vmatpush.bf16.msra.mxu0 %v297
  %314 = vmatpush.bf16.msra.mxu0 %v296
  %315 = vmatmul.bf16.gmra.mxu0 %v302
  %v316 = vpop.f32.mrf.mxu0
  %v317 = vadd.f32 0.0, %v316
  %v318 = vpop.f32.mrf.mxu0
  %v319 = vadd.f32 0.0, %v318
  %320 = vmatmul.bf16.gmra.mxu0 %v305
  %v321 = vpop.f32.mrf.mxu0
  %v322 = vadd.f32 0.0, %v321
  %v323 = vpop.f32.mrf.mxu0
  %v324 = vadd.f32 0.0, %v323
  %325 = vdwg.mxu0
  %v326 = vpack.c.bf16 %v317, %v317
  %v327 = vpack.c.bf16 %v319, %v319
  %v328 = vpack.c.bf16 %v322, %v322
  %v329 = vpack.c.bf16 %v324, %v324
  %s330 = scalar_lea.vmem %s1, 16
  %v331 = vld [vmem:[%s330] sm:$0xf]
  %v332 = vld [vmem:[%s330 + $0x4] sm:$0xf]
  %v333 = vld [vmem:[%s330 + $0x8] sm:$0xf]
  %v334 = vld [vmem:[%s330 + $0xc] sm:$0xf]
  %v339 = vunpack.c.l.b16 %v331
  %v340 = vunpack.c.l.b16 %v332
  %v341 = vunpack.c.l.b16 %v333
  %v342 = vunpack.c.l.b16 %v334
  %v343 = vpack.c.b16 %v340, %v339
  %v344 = vpack.c.b16 %v342, %v341
  %v346 = vsel %vm300, %v343, 0
  %v349 = vsel %vm300, %v344, 0
  %351 = vmatpush.bf16.msra.mxu0 0
  %352 = vmatpush.bf16.msra.mxu0 0
  %353 = vmatpush.bf16.msra.mxu0 0
  %354 = vmatpush.bf16.msra.mxu0 0
  %355 = vmatpush.bf16.msra.mxu0 0
  %356 = vmatpush.bf16.msra.mxu0 0
  %357 = vmatpush.bf16.msra.mxu0 %v297
  %358 = vmatpush.bf16.msra.mxu0 %v296
  %359 = vmatmul.bf16.gmra.mxu0 %v346
  %v360 = vpop.f32.mrf.mxu0
  %v361 = vadd.f32 0.0, %v360
  %v362 = vpop.f32.mrf.mxu0
  %v363 = vadd.f32 0.0, %v362
  %364 = vmatmul.bf16.gmra.mxu0 %v349
  %v365 = vpop.f32.mrf.mxu0
  %v366 = vadd.f32 0.0, %v365
  %v367 = vpop.f32.mrf.mxu0
  %v368 = vadd.f32 0.0, %v367
  %369 = vdwg.mxu0
  %v370 = vpack.c.bf16 %v361, %v361
  %v371 = vpack.c.bf16 %v363, %v363
  %v372 = vpack.c.bf16 %v366, %v366
  %v373 = vpack.c.bf16 %v368, %v368
  %v378 = vunpack.c.l.b16 %v326
  %v379 = vunpack.c.l.b16 %v327
  %v380 = vunpack.c.l.b16 %v328
  %v381 = vunpack.c.l.b16 %v329
  %v382 = vpack.c.b16 %v379, %v378
  %v383 = vpack.c.b16 %v381, %v380
  %384 = vrot.lane.b32.xlu0 %v382, 24
  %v385 = vpop.permute.xlu0 %384
  %386 = vrot.lane.b32.xlu0 %v383, 24
  %v387 = vpop.permute.xlu0 %386
  %v392 = vunpack.c.l.b16 %v370
  %v393 = vunpack.c.l.b16 %v371
  %v394 = vunpack.c.l.b16 %v372
  %v395 = vunpack.c.l.b16 %v373
  %v396 = vpack.c.b16 %v393, %v392
  %v397 = vpack.c.b16 %v395, %v394
  %398 = vrot.lane.b32.xlu0 %v396, 48
  %v399 = vpop.permute.xlu0 %398
  %400 = vrot.lane.b32.xlu0 %v397, 48
  %v401 = vpop.permute.xlu0 %400
  %v404 = vsel %vm192, %v296, %v385
  %v407 = vsel %vm192, %v297, %v387
  %vm408 = vcmask 392192
  %v410 = vsel %vm408, %v404, %v399
  %v412 = vsel %vm408, %v407, %v401
  %v413 = vld [vmem:[%s2] sm:$0xff]
  %v414 = vld [vmem:[%s2 + $0x8] sm:$0xff]
  %v415 = vld [vmem:[%s2 + $0x10] sm:$0xff]
  %v416 = vld [vmem:[%s2 + $0x18] sm:$0xff]
  %v417 = vld [vmem:[%s2 + $0x20] sm:$0xff]
  %v418 = vld [vmem:[%s2 + $0x28] sm:$0xff]
  %v419 = vld [vmem:[%s2 + $0x30] sm:$0xff]
  %v420 = vld [vmem:[%s2 + $0x38] sm:$0xff]
  %v421 = vld [vmem:[%s2 + $0x40] sm:$0xff]
  %v422 = vld [vmem:[%s3] sm:$0xff]
  %v423 = vld [vmem:[%s3 + $0x8] sm:$0xff]
  %v424 = vld [vmem:[%s3 + $0x10] sm:$0xff]
  %v425 = vld [vmem:[%s3 + $0x18] sm:$0xff]
  %v426 = vld [vmem:[%s3 + $0x20] sm:$0xff]
  %v427 = vld [vmem:[%s3 + $0x28] sm:$0xff]
  %v428 = vld [vmem:[%s3 + $0x30] sm:$0xff]
  %v429 = vld [vmem:[%s3 + $0x38] sm:$0xff]
  %v439 = vunpack.c.l.b16 %v413
  %v440 = vunpack.c.h.b16 %v413
  %v441 = vunpack.c.l.b16 %v414
  %v442 = vunpack.c.h.b16 %v414
  %v443 = vunpack.c.l.b16 %v415
  %v444 = vunpack.c.h.b16 %v415
  %v445 = vunpack.c.l.b16 %v416
  %v446 = vunpack.c.h.b16 %v416
  %v447 = vunpack.c.l.b16 %v417
  %v448 = vunpack.c.h.b16 %v417
  %v449 = vunpack.c.l.b16 %v418
  %v450 = vunpack.c.h.b16 %v418
  %v451 = vunpack.c.l.b16 %v419
  %v452 = vunpack.c.h.b16 %v419
  %v453 = vunpack.c.l.b16 %v420
  %v454 = vunpack.c.h.b16 %v420
  %v455 = vunpack.c.l.b16 %v421
  %v456 = vunpack.c.h.b16 %v421
  %v457 = vpack.c.b16 %v441, %v439
  %v458 = vpack.c.b16 %v442, %v440
  %v459 = vpack.c.b16 %v445, %v443
  %v460 = vpack.c.b16 %v446, %v444
  %v461 = vpack.c.b16 %v449, %v447
  %v462 = vpack.c.b16 %v450, %v448
  %v463 = vpack.c.b16 %v453, %v451
  %v464 = vpack.c.b16 %v454, %v452
  %v465 = vpack.c.b16 %v455, %v455
  %v466 = vpack.c.b16 %v456, %v456
  %vm475 = vcmask 588800
  %v476 = vsel %vm475, %v410, 0
  %v478 = vsel %vm475, %v412, 0
  %vm480 = vcmask 1043456
  %v482 = vsel %vm480, %v465, 0
  %v485 = vsel %vm480, %v466, 0
  %487 = vmatpush.bf16.msra.mxu0 0
  %488 = vmatpush.bf16.msra.mxu0 0
  %489 = vmatpush.bf16.msra.mxu0 0
  %490 = vmatpush.bf16.msra.mxu0 %v482
  %491 = vmatpush.bf16.msra.mxu0 %v463
  %492 = vmatpush.bf16.msra.mxu0 %v461
  %493 = vmatpush.bf16.msra.mxu0 %v459
  %494 = vmatpush.bf16.msra.mxu0 %v457
  %495 = vmatmul.bf16.gmra.mxu0 %v476
  %v496 = vpop.f32.mrf.mxu0
  %v497 = vadd.f32 %v422, %v496
  %v498 = vpop.f32.mrf.mxu0
  %v499 = vadd.f32 %v424, %v498
  %500 = vmatmul.bf16.gmra.mxu0 %v478
  %v501 = vpop.f32.mrf.mxu0
  %v502 = vadd.f32 %v426, %v501
  %v503 = vpop.f32.mrf.mxu0
  %v504 = vadd.f32 %v428, %v503
  %505 = vdwg.mxu0
  %506 = vmatpush.bf16.msra.mxu0 0
  %507 = vmatpush.bf16.msra.mxu0 0
  %508 = vmatpush.bf16.msra.mxu0 0
  %509 = vmatpush.bf16.msra.mxu0 %v485
  %510 = vmatpush.bf16.msra.mxu0 %v464
  %511 = vmatpush.bf16.msra.mxu0 %v462
  %512 = vmatpush.bf16.msra.mxu0 %v460
  %513 = vmatpush.bf16.msra.mxu0 %v458
  %514 = vmatmul.bf16.gmra.mxu0 %v476
  %v515 = vpop.f32.mrf.mxu0
  %v516 = vadd.f32 %v423, %v515
  %v517 = vpop.f32.mrf.mxu0
  %v518 = vadd.f32 %v425, %v517
  %519 = vmatmul.bf16.gmra.mxu0 %v478
  %v520 = vpop.f32.mrf.mxu0
  %v521 = vadd.f32 %v427, %v520
  %v522 = vpop.f32.mrf.mxu0
  %v523 = vadd.f32 %v429, %v522
  %524 = vdwg.mxu0
  %vm525 = vcmp.ge.f32.partialorder %v497, 0.0
  %vm526 = vcmp.ge.f32.partialorder %v516, 0.0
  %vm527 = vcmp.ge.f32.partialorder %v499, 0.0
  %vm528 = vcmp.ge.f32.partialorder %v518, 0.0
  %vm529 = vcmp.ge.f32.partialorder %v502, 0.0
  %vm530 = vcmp.ge.f32.partialorder %v521, 0.0
  %vm531 = vcmp.ge.f32.partialorder %v504, 0.0
  %vm532 = vcmp.ge.f32.partialorder %v523, 0.0
  %v533 = vmul.f32 %v497, 0.01
  %v534 = vmul.f32 %v516, 0.01
  %v535 = vmul.f32 %v499, 0.01
  %v536 = vmul.f32 %v518, 0.01
  %v537 = vmul.f32 %v502, 0.01
  %v538 = vmul.f32 %v521, 0.01
  %v539 = vmul.f32 %v504, 0.01
  %v540 = vmul.f32 %v523, 0.01
  %v541 = vsel %vm525, %v497, %v533
  %v542 = vsel %vm526, %v516, %v534
  %v543 = vsel %vm527, %v499, %v535
  %v544 = vsel %vm528, %v518, %v536
  %v545 = vsel %vm529, %v502, %v537
  %v546 = vsel %vm530, %v521, %v538
  %v547 = vsel %vm531, %v504, %v539
  %v548 = vsel %vm532, %v523, %v540
  %s549 = smul.u32 4, 72
  %s550 = smul.u32 %s549, 2
  %s551 = sshll.u32 %s550, 4
  %552 = dma.done [#allocation3], %s551
  %v553 = vpack.c.bf16 %v542, %v541
  %v554 = vpack.c.bf16 %v544, %v543
  %v555 = vpack.c.bf16 %v546, %v545
  %v556 = vpack.c.bf16 %v548, %v547
  %v557 = vld [vmem:[%s1] sm:$0xf]
  %v558 = vld [vmem:[%s1 + $0x4] sm:$0xf]
  %v559 = vld [vmem:[%s1 + $0x8] sm:$0xf]
  %v560 = vld [vmem:[%s1 + $0xc] sm:$0xf]
  %v565 = vunpack.c.l.b16 %v557
  %v566 = vunpack.c.l.b16 %v558
  %v567 = vunpack.c.l.b16 %v559
  %v568 = vunpack.c.l.b16 %v560
  %v569 = vpack.c.b16 %v566, %v565
  %v570 = vpack.c.b16 %v568, %v567
  %v575 = vunpack.c.l.b16 %v553
  %v576 = vunpack.c.h.b16 %v553
  %v577 = vunpack.c.l.b16 %v554
  %v578 = vunpack.c.h.b16 %v554
  %v579 = vunpack.c.l.b16 %v555
  %v580 = vunpack.c.h.b16 %v555
  %v581 = vunpack.c.l.b16 %v556
  %v582 = vunpack.c.h.b16 %v556
  %v583 = vpack.c.b16 %v577, %v575
  %v584 = vpack.c.b16 %v578, %v576
  %v585 = vpack.c.b16 %v581, %v579
  %v586 = vpack.c.b16 %v582, %v580
  %v592 = vsel %vm300, %v569, 0
  %v595 = vsel %vm300, %v570, 0
  %597 = vmatpush.bf16.msra.mxu0 0
  %598 = vmatpush.bf16.msra.mxu0 0
  %599 = vmatpush.bf16.msra.mxu0 0
  %600 = vmatpush.bf16.msra.mxu0 0
  %601 = vmatpush.bf16.msra.mxu0 0
  %602 = vmatpush.bf16.msra.mxu0 0
  %603 = vmatpush.bf16.msra.mxu0 %v585
  %604 = vmatpush.bf16.msra.mxu0 %v583
  %605 = vmatmul.bf16.gmra.mxu0 %v592
  %v606 = vpop.f32.mrf.mxu0
  %v607 = vadd.f32 0.0, %v606
  %v608 = vpop.f32.mrf.mxu0
  %v609 = vadd.f32 0.0, %v608
  %610 = vmatmul.bf16.gmra.mxu0 %v595
  %v611 = vpop.f32.mrf.mxu0
  %v612 = vadd.f32 0.0, %v611
  %v613 = vpop.f32.mrf.mxu0
  %v614 = vadd.f32 0.0, %v613
  %615 = vdwg.mxu0
  %616 = vmatpush.bf16.msra.mxu0 0
  %617 = vmatpush.bf16.msra.mxu0 0
  %618 = vmatpush.bf16.msra.mxu0 0
  %619 = vmatpush.bf16.msra.mxu0 0
  %620 = vmatpush.bf16.msra.mxu0 0
  %621 = vmatpush.bf16.msra.mxu0 0
  %622 = vmatpush.bf16.msra.mxu0 %v586
  %623 = vmatpush.bf16.msra.mxu0 %v584
  %624 = vmatmul.bf16.gmra.mxu0 %v592
  %v625 = vpop.f32.mrf.mxu0
  %v626 = vadd.f32 0.0, %v625
  %v627 = vpop.f32.mrf.mxu0
  %v628 = vadd.f32 0.0, %v627
  %629 = vmatmul.bf16.gmra.mxu0 %v595
  %v630 = vpop.f32.mrf.mxu0
  %v631 = vadd.f32 0.0, %v630
  %v632 = vpop.f32.mrf.mxu0
  %v633 = vadd.f32 0.0, %v632
  %634 = vdwg.mxu0
  %v635 = vpack.c.bf16 %v626, %v607
  %v636 = vpack.c.bf16 %v628, %v609
  %v637 = vpack.c.bf16 %v631, %v612
  %v638 = vpack.c.bf16 %v633, %v614
  %v639 = vld [vmem:[%s330] sm:$0xf]
  %v640 = vld [vmem:[%s330 + $0x4] sm:$0xf]
  %v641 = vld [vmem:[%s330 + $0x8] sm:$0xf]
  %v642 = vld [vmem:[%s330 + $0xc] sm:$0xf]
  %v647 = vunpack.c.l.b16 %v639
  %v648 = vunpack.c.l.b16 %v640
  %v649 = vunpack.c.l.b16 %v641
  %v650 = vunpack.c.l.b16 %v642
  %v651 = vpack.c.b16 %v648, %v647
  %v652 = vpack.c.b16 %v650, %v649
  %v654 = vsel %vm300, %v651, 0
  %v657 = vsel %vm300, %v652, 0
  %659 = vmatpush.bf16.msra.mxu0 0
  %660 = vmatpush.bf16.msra.mxu0 0
  %661 = vmatpush.bf16.msra.mxu0 0
  %662 = vmatpush.bf16.msra.mxu0 0
  %663 = vmatpush.bf16.msra.mxu0 0
  %664 = vmatpush.bf16.msra.mxu0 0
  %665 = vmatpush.bf16.msra.mxu0 %v585
  %666 = vmatpush.bf16.msra.mxu0 %v583
  %667 = vmatmul.bf16.gmra.mxu0 %v654
  %v668 = vpop.f32.mrf.mxu0
  %v669 = vadd.f32 0.0, %v668
  %v670 = vpop.f32.mrf.mxu0
  %v671 = vadd.f32 0.0, %v670
  %672 = vmatmul.bf16.gmra.mxu0 %v657
  %v673 = vpop.f32.mrf.mxu0
  %v674 = vadd.f32 0.0, %v673
  %v675 = vpop.f32.mrf.mxu0
  %v676 = vadd.f32 0.0, %v675
  %677 = vdwg.mxu0
  %678 = vmatpush.bf16.msra.mxu0 0
  %679 = vmatpush.bf16.msra.mxu0 0
  %680 = vmatpush.bf16.msra.mxu0 0
  %681 = vmatpush.bf16.msra.mxu0 0
  %682 = vmatpush.bf16.msra.mxu0 0
  %683 = vmatpush.bf16.msra.mxu0 0
  %684 = vmatpush.bf16.msra.mxu0 %v586
  %685 = vmatpush.bf16.msra.mxu0 %v584
  %686 = vmatmul.bf16.gmra.mxu0 %v654
  %v687 = vpop.f32.mrf.mxu0
  %v688 = vadd.f32 0.0, %v687
  %v689 = vpop.f32.mrf.mxu0
  %v690 = vadd.f32 0.0, %v689
  %691 = vmatmul.bf16.gmra.mxu0 %v657
  %v692 = vpop.f32.mrf.mxu0
  %v693 = vadd.f32 0.0, %v692
  %v694 = vpop.f32.mrf.mxu0
  %v695 = vadd.f32 0.0, %v694
  %696 = vdwg.mxu0
  %v697 = vpack.c.bf16 %v688, %v669
  %v698 = vpack.c.bf16 %v690, %v671
  %v699 = vpack.c.bf16 %v693, %v674
  %v700 = vpack.c.bf16 %v695, %v676
  %v705 = vunpack.c.l.b16 %v635
  %v706 = vunpack.c.h.b16 %v635
  %v707 = vunpack.c.l.b16 %v636
  %v708 = vunpack.c.h.b16 %v636
  %v709 = vunpack.c.l.b16 %v637
  %v710 = vunpack.c.h.b16 %v637
  %v711 = vunpack.c.l.b16 %v638
  %v712 = vunpack.c.h.b16 %v638
  %v713 = vpack.c.b16 %v707, %v705
  %v714 = vpack.c.b16 %v708, %v706
  %v715 = vpack.c.b16 %v711, %v709
  %v716 = vpack.c.b16 %v712, %v710
  %717 = vrot.lane.b32.xlu0 %v713, 64
  %v718 = vpop.permute.xlu0 %717
  %719 = vrot.lane.b32.xlu0 %v714, 64
  %v720 = vpop.permute.xlu0 %719
  %721 = vrot.lane.b32.xlu0 %v715, 64
  %v722 = vpop.permute.xlu0 %721
  %723 = vrot.lane.b32.xlu0 %v716, 64
  %v724 = vpop.permute.xlu0 %723
  %vm725 = vcmask 523264
  %v726 = vsel %vm725, %v718, %v720
  %v727 = vsel %vm725, %v722, %v724
  %v734 = vunpack.c.l.b16 %v697
  %v735 = vunpack.c.h.b16 %v697
  %v736 = vunpack.c.l.b16 %v698
  %v737 = vunpack.c.h.b16 %v698
  %v738 = vunpack.c.l.b16 %v699
  %v739 = vunpack.c.h.b16 %v699
  %v740 = vunpack.c.l.b16 %v700
  %v741 = vunpack.c.h.b16 %v700
  %v742 = vpack.c.b16 %v736, %v734
  %v743 = vpack.c.b16 %v737, %v735
  %v744 = vpack.c.b16 %v740, %v738
  %v745 = vpack.c.b16 %v741, %v739
  %vm748 = vcmask 523264
  %v751 = vsel %vm748, %v584, %v718
  %v755 = vsel %vm748, %v586, %v722
  %v757 = vld [vmem:[#allocation2] sm:$0xff]
  %v758 = vld [vmem:[#allocation2 + $0x8] sm:$0xff]
  %v759 = vld [vmem:[#allocation2 + $0x10] sm:$0xff]
  %v760 = vld [vmem:[#allocation2 + $0x18] sm:$0xff]
  %v761 = vld [vmem:[#allocation2 + $0x20] sm:$0xff]
  %v762 = vld [vmem:[#allocation2 + $0x28] sm:$0xff]
  %v763 = vld [vmem:[#allocation2 + $0x30] sm:$0xff]
  %v764 = vld [vmem:[#allocation2 + $0x38] sm:$0xff]
  %v765 = vld [vmem:[#allocation2 + $0x40] sm:$0xff]
  %v766 = vld [vmem:[#allocation2 + $0x48] sm:$0xff]
  %v767 = vld [vmem:[#allocation2 + $0x50] sm:$0xff]
  %v768 = vld [vmem:[#allocation2 + $0x58] sm:$0xff]
  %v769 = vld [vmem:[#allocation2 + $0x60] sm:$0xff]
  %v770 = vld [vmem:[#allocation2 + $0x68] sm:$0xff]
  %v771 = vld [vmem:[#allocation2 + $0x70] sm:$0xff]
  %v772 = vld [vmem:[#allocation2 + $0x78] sm:$0xff]
  %v773 = vld [vmem:[#allocation2 + $0x80] sm:$0xff]
  %v774 = vld [vmem:[#allocation2 + $0x88] sm:$0xff]
  %v775 = vld [vmem:[#allocation2 + $0x90] sm:$0xff]
  %v776 = vld [vmem:[#allocation2 + $0x98] sm:$0xff]
  %v777 = vld [vmem:[#allocation2 + $0xa0] sm:$0xff]
  %v778 = vld [vmem:[#allocation2 + $0xa8] sm:$0xff]
  %v779 = vld [vmem:[#allocation2 + $0xb0] sm:$0xff]
  %v780 = vld [vmem:[#allocation2 + $0xb8] sm:$0xff]
  %v781 = vld [vmem:[#allocation2 + $0xc0] sm:$0xff]
  %v782 = vld [vmem:[#allocation2 + $0xc8] sm:$0xff]
  %v783 = vld [vmem:[#allocation2 + $0xd0] sm:$0xff]
  %v784 = vld [vmem:[#allocation2 + $0xd8] sm:$0xff]
  %v785 = vld [vmem:[#allocation2 + $0xe0] sm:$0xff]
  %v786 = vld [vmem:[#allocation2 + $0xe8] sm:$0xff]
  %v787 = vld [vmem:[#allocation2 + $0xf0] sm:$0xff]
  %v788 = vld [vmem:[#allocation2 + $0xf8] sm:$0xff]
  %v789 = vld [vmem:[#allocation2 + $0x100] sm:$0xff]
  %v790 = vld [vmem:[#allocation2 + $0x108] sm:$0xff]
  %v791 = vld [vmem:[#allocation2 + $0x110] sm:$0xff]
  %v792 = vld [vmem:[#allocation2 + $0x118] sm:$0xff]
  %v793 = vld [vmem:[#allocation2 + $0x120] sm:$0xff]
  %v794 = vld [vmem:[#allocation2 + $0x128] sm:$0xff]
  %v795 = vld [vmem:[#allocation2 + $0x130] sm:$0xff]
  %v796 = vld [vmem:[#allocation2 + $0x138] sm:$0xff]
  %v797 = vld [vmem:[#allocation2 + $0x140] sm:$0xff]
  %v798 = vld [vmem:[#allocation2 + $0x148] sm:$0xff]
  %v799 = vld [vmem:[#allocation2 + $0x150] sm:$0xff]
  %v800 = vld [vmem:[#allocation2 + $0x158] sm:$0xff]
  %v801 = vld [vmem:[#allocation2 + $0x160] sm:$0xff]
  %v802 = vld [vmem:[#allocation2 + $0x168] sm:$0xff]
  %v803 = vld [vmem:[#allocation2 + $0x170] sm:$0xff]
  %v804 = vld [vmem:[#allocation2 + $0x178] sm:$0xff]
  %v805 = vld [vmem:[#allocation2 + $0x180] sm:$0xff]
  %v806 = vld [vmem:[#allocation2 + $0x188] sm:$0xff]
  %v807 = vld [vmem:[#allocation2 + $0x190] sm:$0xff]
  %v808 = vld [vmem:[#allocation2 + $0x198] sm:$0xff]
  %v809 = vld [vmem:[#allocation2 + $0x1a0] sm:$0xff]
  %v810 = vld [vmem:[#allocation2 + $0x1a8] sm:$0xff]
  %v811 = vld [vmem:[#allocation2 + $0x1b0] sm:$0xff]
  %v812 = vld [vmem:[#allocation2 + $0x1b8] sm:$0xff]
  %v813 = vld [vmem:[#allocation2 + $0x1c0] sm:$0xff]
  %v814 = vld [vmem:[#allocation2 + $0x1c8] sm:$0xff]
  %v815 = vld [vmem:[#allocation2 + $0x1d0] sm:$0xff]
  %v816 = vld [vmem:[#allocation2 + $0x1d8] sm:$0xff]
  %v817 = vld [vmem:[#allocation2 + $0x1e0] sm:$0xff]
  %v818 = vld [vmem:[#allocation2 + $0x1e8] sm:$0xff]
  %v819 = vld [vmem:[#allocation2 + $0x1f0] sm:$0xff]
  %v820 = vld [vmem:[#allocation2 + $0x1f8] sm:$0xff]
  %v821 = vld [vmem:[#allocation2 + $0x200] sm:$0xff]
  %v822 = vld [vmem:[#allocation2 + $0x208] sm:$0xff]
  %v823 = vld [vmem:[#allocation2 + $0x210] sm:$0xff]
  %v824 = vld [vmem:[#allocation2 + $0x218] sm:$0xff]
  %v825 = vld [vmem:[#allocation2 + $0x220] sm:$0xff]
  %v826 = vld [vmem:[#allocation2 + $0x228] sm:$0xff]
  %v827 = vld [vmem:[#allocation2 + $0x230] sm:$0xff]
  %v828 = vld [vmem:[#allocation2 + $0x238] sm:$0xff]
  %v829 = vld [vmem:[%s5] sm:$0xff]
  %v830 = vld [vmem:[%s5 + $0x8] sm:$0xff]
  %v831 = vld [vmem:[%s5 + $0x10] sm:$0xff]
  %v832 = vld [vmem:[%s5 + $0x18] sm:$0xff]
  %v833 = vld [vmem:[%s5 + $0x20] sm:$0xff]
  %v834 = vld [vmem:[%s5 + $0x28] sm:$0xff]
  %v835 = vld [vmem:[%s5 + $0x30] sm:$0xff]
  %v836 = vld [vmem:[%s5 + $0x38] sm:$0xff]
  %v909 = vunpack.c.l.b16 %v757
  %v910 = vunpack.c.h.b16 %v757
  %v911 = vunpack.c.l.b16 %v758
  %v912 = vunpack.c.h.b16 %v758
  %v913 = vunpack.c.l.b16 %v759
  %v914 = vunpack.c.h.b16 %v759
  %v915 = vunpack.c.l.b16 %v760
  %v916 = vunpack.c.h.b16 %v760
  %v917 = vunpack.c.l.b16 %v761
  %v918 = vunpack.c.h.b16 %v761
  %v919 = vunpack.c.l.b16 %v762
  %v920 = vunpack.c.h.b16 %v762
  %v921 = vunpack.c.l.b16 %v763
  %v922 = vunpack.c.h.b16 %v763
  %v923 = vunpack.c.l.b16 %v764
  %v924 = vunpack.c.h.b16 %v764
  %v925 = vunpack.c.l.b16 %v765
  %v926 = vunpack.c.h.b16 %v765
  %v927 = vunpack.c.l.b16 %v766
  %v928 = vunpack.c.h.b16 %v766
  %v929 = vunpack.c.l.b16 %v767
  %v930 = vunpack.c.h.b16 %v767
  %v931 = vunpack.c.l.b16 %v768
  %v932 = vunpack.c.h.b16 %v768
  %v933 = vunpack.c.l.b16 %v769
  %v934 = vunpack.c.h.b16 %v769
  %v935 = vunpack.c.l.b16 %v770
  %v936 = vunpack.c.h.b16 %v770
  %v937 = vunpack.c.l.b16 %v771
  %v938 = vunpack.c.h.b16 %v771
  %v939 = vunpack.c.l.b16 %v772
  %v940 = vunpack.c.h.b16 %v772
  %v941 = vunpack.c.l.b16 %v773
  %v942 = vunpack.c.h.b16 %v773
  %v943 = vunpack.c.l.b16 %v774
  %v944 = vunpack.c.h.b16 %v774
  %v945 = vunpack.c.l.b16 %v775
  %v946 = vunpack.c.h.b16 %v775
  %v947 = vunpack.c.l.b16 %v776
  %v948 = vunpack.c.h.b16 %v776
  %v949 = vunpack.c.l.b16 %v777
  %v950 = vunpack.c.h.b16 %v777
  %v951 = vunpack.c.l.b16 %v778
  %v952 = vunpack.c.h.b16 %v778
  %v953 = vunpack.c.l.b16 %v779
  %v954 = vunpack.c.h.b16 %v779
  %v955 = vunpack.c.l.b16 %v780
  %v956 = vunpack.c.h.b16 %v780
  %v957 = vunpack.c.l.b16 %v781
  %v958 = vunpack.c.h.b16 %v781
  %v959 = vunpack.c.l.b16 %v782
  %v960 = vunpack.c.h.b16 %v782
  %v961 = vunpack.c.l.b16 %v783
  %v962 = vunpack.c.h.b16 %v783
  %v963 = vunpack.c.l.b16 %v784
  %v964 = vunpack.c.h.b16 %v784
  %v965 = vunpack.c.l.b16 %v785
  %v966 = vunpack.c.h.b16 %v785
  %v967 = vunpack.c.l.b16 %v786
  %v968 = vunpack.c.h.b16 %v786
  %v969 = vunpack.c.l.b16 %v787
  %v970 = vunpack.c.h.b16 %v787
  %v971 = vunpack.c.l.b16 %v788
  %v972 = vunpack.c.h.b16 %v788
  %v973 = vunpack.c.l.b16 %v789
  %v974 = vunpack.c.h.b16 %v789
  %v975 = vunpack.c.l.b16 %v790
  %v976 = vunpack.c.h.b16 %v790
  %v977 = vunpack.c.l.b16 %v791
  %v978 = vunpack.c.h.b16 %v791
  %v979 = vunpack.c.l.b16 %v792
  %v980 = vunpack.c.h.b16 %v792
  %v981 = vunpack.c.l.b16 %v793
  %v982 = vunpack.c.h.b16 %v793
  %v983 = vunpack.c.l.b16 %v794
  %v984 = vunpack.c.h.b16 %v794
  %v985 = vunpack.c.l.b16 %v795
  %v986 = vunpack.c.h.b16 %v795
  %v987 = vunpack.c.l.b16 %v796
  %v988 = vunpack.c.h.b16 %v796
  %v989 = vunpack.c.l.b16 %v797
  %v990 = vunpack.c.h.b16 %v797
  %v991 = vunpack.c.l.b16 %v798
  %v992 = vunpack.c.h.b16 %v798
  %v993 = vunpack.c.l.b16 %v799
  %v994 = vunpack.c.h.b16 %v799
  %v995 = vunpack.c.l.b16 %v800
  %v996 = vunpack.c.h.b16 %v800
  %v997 = vunpack.c.l.b16 %v801
  %v998 = vunpack.c.h.b16 %v801
  %v999 = vunpack.c.l.b16 %v802
  %v1000 = vunpack.c.h.b16 %v802
  %v1001 = vunpack.c.l.b16 %v803
  %v1002 = vunpack.c.h.b16 %v803
  %v1003 = vunpack.c.l.b16 %v804
  %v1004 = vunpack.c.h.b16 %v804
  %v1005 = vunpack.c.l.b16 %v805
  %v1006 = vunpack.c.h.b16 %v805
  %v1007 = vunpack.c.l.b16 %v806
  %v1008 = vunpack.c.h.b16 %v806
  %v1009 = vunpack.c.l.b16 %v807
  %v1010 = vunpack.c.h.b16 %v807
  %v1011 = vunpack.c.l.b16 %v808
  %v1012 = vunpack.c.h.b16 %v808
  %v1013 = vunpack.c.l.b16 %v809
  %v1014 = vunpack.c.h.b16 %v809
  %v1015 = vunpack.c.l.b16 %v810
  %v1016 = vunpack.c.h.b16 %v810
  %v1017 = vunpack.c.l.b16 %v811
  %v1018 = vunpack.c.h.b16 %v811
  %v1019 = vunpack.c.l.b16 %v812
  %v1020 = vunpack.c.h.b16 %v812
  %v1021 = vunpack.c.l.b16 %v813
  %v1022 = vunpack.c.h.b16 %v813
  %v1023 = vunpack.c.l.b16 %v814
  %v1024 = vunpack.c.h.b16 %v814
  %v1025 = vunpack.c.l.b16 %v815
  %v1026 = vunpack.c.h.b16 %v815
  %v1027 = vunpack.c.l.b16 %v816
  %v1028 = vunpack.c.h.b16 %v816
  %v1029 = vunpack.c.l.b16 %v817
  %v1030 = vunpack.c.h.b16 %v817
  %v1031 = vunpack.c.l.b16 %v818
  %v1032 = vunpack.c.h.b16 %v818
  %v1033 = vunpack.c.l.b16 %v819
  %v1034 = vunpack.c.h.b16 %v819
  %v1035 = vunpack.c.l.b16 %v820
  %v1036 = vunpack.c.h.b16 %v820
  %v1037 = vunpack.c.l.b16 %v821
  %v1038 = vunpack.c.h.b16 %v821
  %v1039 = vunpack.c.l.b16 %v822
  %v1040 = vunpack.c.h.b16 %v822
  %v1041 = vunpack.c.l.b16 %v823
  %v1042 = vunpack.c.h.b16 %v823
  %v1043 = vunpack.c.l.b16 %v824
  %v1044 = vunpack.c.h.b16 %v824
  %v1045 = vunpack.c.l.b16 %v825
  %v1046 = vunpack.c.h.b16 %v825
  %v1047 = vunpack.c.l.b16 %v826
  %v1048 = vunpack.c.h.b16 %v826
  %v1049 = vunpack.c.l.b16 %v827
  %v1050 = vunpack.c.h.b16 %v827
  %v1051 = vunpack.c.l.b16 %v828
  %v1052 = vunpack.c.h.b16 %v828
  %v1053 = vpack.c.b16 %v911, %v909
  %v1054 = vpack.c.b16 %v912, %v910
  %v1055 = vpack.c.b16 %v915, %v913
  %v1056 = vpack.c.b16 %v916, %v914
  %v1057 = vpack.c.b16 %v919, %v917
  %v1058 = vpack.c.b16 %v920, %v918
  %v1059 = vpack.c.b16 %v923, %v921
  %v1060 = vpack.c.b16 %v924, %v922
  %v1061 = vpack.c.b16 %v927, %v925
  %v1062 = vpack.c.b16 %v928, %v926
  %v1063 = vpack.c.b16 %v931, %v929
  %v1064 = vpack.c.b16 %v932, %v930
  %v1065 = vpack.c.b16 %v935, %v933
  %v1066 = vpack.c.b16 %v936, %v934
  %v1067 = vpack.c.b16 %v939, %v937
  %v1068 = vpack.c.b16 %v940, %v938
  %v1069 = vpack.c.b16 %v943, %v941
  %v1070 = vpack.c.b16 %v944, %v942
  %v1071 = vpack.c.b16 %v947, %v945
  %v1072 = vpack.c.b16 %v948, %v946
  %v1073 = vpack.c.b16 %v951, %v949
  %v1074 = vpack.c.b16 %v952, %v950
  %v1075 = vpack.c.b16 %v955, %v953
  %v1076 = vpack.c.b16 %v956, %v954
  %v1077 = vpack.c.b16 %v959, %v957
  %v1078 = vpack.c.b16 %v960, %v958
  %v1079 = vpack.c.b16 %v963, %v961
  %v1080 = vpack.c.b16 %v964, %v962
  %v1081 = vpack.c.b16 %v967, %v965
  %v1082 = vpack.c.b16 %v968, %v966
  %v1083 = vpack.c.b16 %v971, %v969
  %v1084 = vpack.c.b16 %v972, %v970
  %v1085 = vpack.c.b16 %v975, %v973
  %v1086 = vpack.c.b16 %v976, %v974
  %v1087 = vpack.c.b16 %v979, %v977
  %v1088 = vpack.c.b16 %v980, %v978
  %v1089 = vpack.c.b16 %v983, %v981
  %v1090 = vpack.c.b16 %v984, %v982
  %v1091 = vpack.c.b16 %v987, %v985
  %v1092 = vpack.c.b16 %v988, %v986
  %v1093 = vpack.c.b16 %v991, %v989
  %v1094 = vpack.c.b16 %v992, %v990
  %v1095 = vpack.c.b16 %v995, %v993
  %v1096 = vpack.c.b16 %v996, %v994
  %v1097 = vpack.c.b16 %v999, %v997
  %v1098 = vpack.c.b16 %v1000, %v998
  %v1099 = vpack.c.b16 %v1003, %v1001
  %v1100 = vpack.c.b16 %v1004, %v1002
  %v1101 = vpack.c.b16 %v1007, %v1005
  %v1102 = vpack.c.b16 %v1008, %v1006
  %v1103 = vpack.c.b16 %v1011, %v1009
  %v1104 = vpack.c.b16 %v1012, %v1010
  %v1105 = vpack.c.b16 %v1015, %v1013
  %v1106 = vpack.c.b16 %v1016, %v1014
  %v1107 = vpack.c.b16 %v1019, %v1017
  %v1108 = vpack.c.b16 %v1020, %v1018
  %v1109 = vpack.c.b16 %v1023, %v1021
  %v1110 = vpack.c.b16 %v1024, %v1022
  %v1111 = vpack.c.b16 %v1027, %v1025
  %v1112 = vpack.c.b16 %v1028, %v1026
  %v1113 = vpack.c.b16 %v1031, %v1029
  %v1114 = vpack.c.b16 %v1032, %v1030
  %v1115 = vpack.c.b16 %v1035, %v1033
  %v1116 = vpack.c.b16 %v1036, %v1034
  %v1117 = vpack.c.b16 %v1039, %v1037
  %v1118 = vpack.c.b16 %v1040, %v1038
  %v1119 = vpack.c.b16 %v1043, %v1041
  %v1120 = vpack.c.b16 %v1044, %v1042
  %v1121 = vpack.c.b16 %v1047, %v1045
  %v1122 = vpack.c.b16 %v1048, %v1046
  %v1123 = vpack.c.b16 %v1051, %v1049
  %v1124 = vpack.c.b16 %v1052, %v1050
  %v1198 = vsel %vm748, %v743, 0
  %v1201 = vsel %vm748, %v745, 0
  %1203 = vmatpush.bf16.msra.mxu0 %v1067
  %1204 = vmatpush.bf16.msra.mxu0 %v1065
  %1205 = vmatpush.bf16.msra.mxu0 %v1063
  %1206 = vmatpush.bf16.msra.mxu0 %v1061
  %1207 = vmatpush.bf16.msra.mxu0 %v1059
  %1208 = vmatpush.bf16.msra.mxu0 %v1057
  %1209 = vmatpush.bf16.msra.mxu0 %v1055
  %1210 = vmatpush.bf16.msra.mxu0 %v1053
  %1211 = vmatmul.bf16.gmra.mxu0 %v583
  %v1212 = vpop.f32.mrf.mxu0
  %v1213 = vadd.f32 %v829, %v1212
  %v1214 = vpop.f32.mrf.mxu0
  %v1215 = vadd.f32 %v831, %v1214
  %1216 = vmatmul.bf16.gmra.mxu0 %v585
  %v1217 = vpop.f32.mrf.mxu0
  %v1218 = vadd.f32 %v833, %v1217
  %v1219 = vpop.f32.mrf.mxu0
  %v1220 = vadd.f32 %v835, %v1219
  %1221 = vdwg.mxu0
  %1222 = vmatpush.bf16.msra.mxu0 %v1083
  %1223 = vmatpush.bf16.msra.mxu0 %v1081
  %1224 = vmatpush.bf16.msra.mxu0 %v1079
  %1225 = vmatpush.bf16.msra.mxu0 %v1077
  %1226 = vmatpush.bf16.msra.mxu0 %v1075
  %1227 = vmatpush.bf16.msra.mxu0 %v1073
  %1228 = vmatpush.bf16.msra.mxu0 %v1071
  %1229 = vmatpush.bf16.msra.mxu0 %v1069
  %1230 = vmatmul.bf16.gmra.mxu0 %v751
  %v1231 = vpop.f32.mrf.mxu0
  %v1232 = vadd.f32 %v1213, %v1231
  %v1233 = vpop.f32.mrf.mxu0
  %v1234 = vadd.f32 %v1215, %v1233
  %1235 = vmatmul.bf16.gmra.mxu0 %v755
  %v1236 = vpop.f32.mrf.mxu0
  %v1237 = vadd.f32 %v1218, %v1236
  %v1238 = vpop.f32.mrf.mxu0
  %v1239 = vadd.f32 %v1220, %v1238
  %1240 = vdwg.mxu0
  %1241 = vmatpush.bf16.msra.mxu0 %v1099
  %1242 = vmatpush.bf16.msra.mxu0 %v1097
  %1243 = vmatpush.bf16.msra.mxu0 %v1095
  %1244 = vmatpush.bf16.msra.mxu0 %v1093
  %1245 = vmatpush.bf16.msra.mxu0 %v1091
  %1246 = vmatpush.bf16.msra.mxu0 %v1089
  %1247 = vmatpush.bf16.msra.mxu0 %v1087
  %1248 = vmatpush.bf16.msra.mxu0 %v1085
  %1249 = vmatmul.bf16.gmra.mxu0 %v726
  %v1250 = vpop.f32.mrf.mxu0
  %v1251 = vadd.f32 %v1232, %v1250
  %v1252 = vpop.f32.mrf.mxu0
  %v1253 = vadd.f32 %v1234, %v1252
  %1254 = vmatmul.bf16.gmra.mxu0 %v727
  %v1255 = vpop.f32.mrf.mxu0
  %v1256 = vadd.f32 %v1237, %v1255
  %v1257 = vpop.f32.mrf.mxu0
  %v1258 = vadd.f32 %v1239, %v1257
  %1259 = vdwg.mxu0
  %1260 = vmatpush.bf16.msra.mxu0 %v1115
  %1261 = vmatpush.bf16.msra.mxu0 %v1113
  %1262 = vmatpush.bf16.msra.mxu0 %v1111
  %1263 = vmatpush.bf16.msra.mxu0 %v1109
  %1264 = vmatpush.bf16.msra.mxu0 %v1107
  %1265 = vmatpush.bf16.msra.mxu0 %v1105
  %1266 = vmatpush.bf16.msra.mxu0 %v1103
  %1267 = vmatpush.bf16.msra.mxu0 %v1101
  %1268 = vmatmul.bf16.gmra.mxu0 %v742
  %v1269 = vpop.f32.mrf.mxu0
  %v1270 = vadd.f32 %v1251, %v1269
  %v1271 = vpop.f32.mrf.mxu0
  %v1272 = vadd.f32 %v1253, %v1271
  %1273 = vmatmul.bf16.gmra.mxu0 %v744
  %v1274 = vpop.f32.mrf.mxu0
  %v1275 = vadd.f32 %v1256, %v1274
  %v1276 = vpop.f32.mrf.mxu0
  %v1277 = vadd.f32 %v1258, %v1276
  %1278 = vdwg.mxu0
  %1279 = vmatpush.bf16.msra.mxu0 0
  %1280 = vmatpush.bf16.msra.mxu0 0
  %1281 = vmatpush.bf16.msra.mxu0 0
  %1282 = vmatpush.bf16.msra.mxu0 0
  %1283 = vmatpush.bf16.msra.mxu0 %v1123
  %1284 = vmatpush.bf16.msra.mxu0 %v1121
  %1285 = vmatpush.bf16.msra.mxu0 %v1119
  %1286 = vmatpush.bf16.msra.mxu0 %v1117
  %1287 = vmatmul.bf16.gmra.mxu0 %v1198
  %v1288 = vpop.f32.mrf.mxu0
  %v1289 = vadd.f32 %v1270, %v1288
  %v1290 = vpop.f32.mrf.mxu0
  %v1291 = vadd.f32 %v1272, %v1290
  %1292 = vmatmul.bf16.gmra.mxu0 %v1201
  %v1293 = vpop.f32.mrf.mxu0
  %v1294 = vadd.f32 %v1275, %v1293
  %v1295 = vpop.f32.mrf.mxu0
  %v1296 = vadd.f32 %v1277, %v1295
  %1297 = vdwg.mxu0
  %1298 = vmatpush.bf16.msra.mxu0 %v1068
  %1299 = vmatpush.bf16.msra.mxu0 %v1066
  %1300 = vmatpush.bf16.msra.mxu0 %v1064
  %1301 = vmatpush.bf16.msra.mxu0 %v1062
  %1302 = vmatpush.bf16.msra.mxu0 %v1060
  %1303 = vmatpush.bf16.msra.mxu0 %v1058
  %1304 = vmatpush.bf16.msra.mxu0 %v1056
  %1305 = vmatpush.bf16.msra.mxu0 %v1054
  %1306 = vmatmul.bf16.gmra.mxu0 %v583
  %v1307 = vpop.f32.mrf.mxu0
  %v1308 = vadd.f32 %v830, %v1307
  %v1309 = vpop.f32.mrf.mxu0
  %v1310 = vadd.f32 %v832, %v1309
  %1311 = vmatmul.bf16.gmra.mxu0 %v585
  %v1312 = vpop.f32.mrf.mxu0
  %v1313 = vadd.f32 %v834, %v1312
  %v1314 = vpop.f32.mrf.mxu0
  %v1315 = vadd.f32 %v836, %v1314
  %1316 = vdwg.mxu0
  %1317 = vmatpush.bf16.msra.mxu0 %v1084
  %1318 = vmatpush.bf16.msra.mxu0 %v1082
  %1319 = vmatpush.bf16.msra.mxu0 %v1080
  %1320 = vmatpush.bf16.msra.mxu0 %v1078
  %1321 = vmatpush.bf16.msra.mxu0 %v1076
  %1322 = vmatpush.bf16.msra.mxu0 %v1074
  %1323 = vmatpush.bf16.msra.mxu0 %v1072
  %1324 = vmatpush.bf16.msra.mxu0 %v1070
  %1325 = vmatmul.bf16.gmra.mxu0 %v751
  %v1326 = vpop.f32.mrf.mxu0
  %v1327 = vadd.f32 %v1308, %v1326
  %v1328 = vpop.f32.mrf.mxu0
  %v1329 = vadd.f32 %v1310, %v1328
  %1330 = vmatmul.bf16.gmra.mxu0 %v755
  %v1331 = vpop.f32.mrf.mxu0
  %v1332 = vadd.f32 %v1313, %v1331
  %v1333 = vpop.f32.mrf.mxu0
  %v1334 = vadd.f32 %v1315, %v1333
  %1335 = vdwg.mxu0
  %1336 = vmatpush.bf16.msra.mxu0 %v1100
  %1337 = vmatpush.bf16.msra.mxu0 %v1098
  %1338 = vmatpush.bf16.msra.mxu0 %v1096
  %1339 = vmatpush.bf16.msra.mxu0 %v1094
  %1340 = vmatpush.bf16.msra.mxu0 %v1092
  %1341 = vmatpush.bf16.msra.mxu0 %v1090
  %1342 = vmatpush.bf16.msra.mxu0 %v1088
  %1343 = vmatpush.bf16.msra.mxu0 %v1086
  %1344 = vmatmul.bf16.gmra.mxu0 %v726
  %v1345 = vpop.f32.mrf.mxu0
  %v1346 = vadd.f32 %v1327, %v1345
  %v1347 = vpop.f32.mrf.mxu0
  %v1348 = vadd.f32 %v1329, %v1347
  %1349 = vmatmul.bf16.gmra.mxu0 %v727
  %v1350 = vpop.f32.mrf.mxu0
  %v1351 = vadd.f32 %v1332, %v1350
  %v1352 = vpop.f32.mrf.mxu0
  %v1353 = vadd.f32 %v1334, %v1352
  %1354 = vdwg.mxu0
  %1355 = vmatpush.bf16.msra.mxu0 %v1116
  %1356 = vmatpush.bf16.msra.mxu0 %v1114
  %1357 = vmatpush.bf16.msra.mxu0 %v1112
  %1358 = vmatpush.bf16.msra.mxu0 %v1110
  %1359 = vmatpush.bf16.msra.mxu0 %v1108
  %1360 = vmatpush.bf16.msra.mxu0 %v1106
  %1361 = vmatpush.bf16.msra.mxu0 %v1104
  %1362 = vmatpush.bf16.msra.mxu0 %v1102
  %1363 = vmatmul.bf16.gmra.mxu0 %v742
  %v1364 = vpop.f32.mrf.mxu0
  %v1365 = vadd.f32 %v1346, %v1364
  %v1366 = vpop.f32.mrf.mxu0
  %v1367 = vadd.f32 %v1348, %v1366
  %1368 = vmatmul.bf16.gmra.mxu0 %v744
  %v1369 = vpop.f32.mrf.mxu0
  %v1370 = vadd.f32 %v1351, %v1369
  %v1371 = vpop.f32.mrf.mxu0
  %v1372 = vadd.f32 %v1353, %v1371
  %1373 = vdwg.mxu0
  %1374 = vmatpush.bf16.msra.mxu0 0
  %1375 = vmatpush.bf16.msra.mxu0 0
  %1376 = vmatpush.bf16.msra.mxu0 0
  %1377 = vmatpush.bf16.msra.mxu0 0
  %1378 = vmatpush.bf16.msra.mxu0 %v1124
  %1379 = vmatpush.bf16.msra.mxu0 %v1122
  %1380 = vmatpush.bf16.msra.mxu0 %v1120
  %1381 = vmatpush.bf16.msra.mxu0 %v1118
  %1382 = vmatmul.bf16.gmra.mxu0 %v1198
  %v1383 = vpop.f32.mrf.mxu0
  %v1384 = vadd.f32 %v1365, %v1383
  %v1385 = vpop.f32.mrf.mxu0
  %v1386 = vadd.f32 %v1367, %v1385
  %1387 = vmatmul.bf16.gmra.mxu0 %v1201
  %v1388 = vpop.f32.mrf.mxu0
  %v1389 = vadd.f32 %v1370, %v1388
  %v1390 = vpop.f32.mrf.mxu0
  %v1391 = vadd.f32 %v1372, %v1390
  %1392 = vdwg.mxu0
  %vm1393 = vcmp.ge.f32.partialorder %v1289, 0.0
  %vm1394 = vcmp.ge.f32.partialorder %v1384, 0.0
  %vm1395 = vcmp.ge.f32.partialorder %v1291, 0.0
  %vm1396 = vcmp.ge.f32.partialorder %v1386, 0.0
  %vm1397 = vcmp.ge.f32.partialorder %v1294, 0.0
  %vm1398 = vcmp.ge.f32.partialorder %v1389, 0.0
  %vm1399 = vcmp.ge.f32.partialorder %v1296, 0.0
  %vm1400 = vcmp.ge.f32.partialorder %v1391, 0.0
  %v1401 = vmul.f32 %v1289, 0.01
  %v1402 = vmul.f32 %v1384, 0.01
  %v1403 = vmul.f32 %v1291, 0.01
  %v1404 = vmul.f32 %v1386, 0.01
  %v1405 = vmul.f32 %v1294, 0.01
  %v1406 = vmul.f32 %v1389, 0.01
  %v1407 = vmul.f32 %v1296, 0.01
  %v1408 = vmul.f32 %v1391, 0.01
  %v1409 = vsel %vm1393, %v1289, %v1401
  %v1410 = vsel %vm1394, %v1384, %v1402
  %v1411 = vsel %vm1395, %v1291, %v1403
  %v1412 = vsel %vm1396, %v1386, %v1404
  %v1413 = vsel %vm1397, %v1294, %v1405
  %v1414 = vsel %vm1398, %v1389, %v1406
  %v1415 = vsel %vm1399, %v1296, %v1407
  %v1416 = vsel %vm1400, %v1391, %v1408
  %v1417 = vpack.c.bf16 %v1411, %v1409
  %v1418 = vpack.c.bf16 %v1412, %v1410
  %v1419 = vpack.c.bf16 %v1415, %v1413
  %v1420 = vpack.c.bf16 %v1416, %v1414
  %v1421 = vld [vmem:[%s6] sm:$0xf]
  %v1422 = vld [vmem:[%s6 + $0x4] sm:$0xf]
  %v1423 = vld [vmem:[%s6 + $0x8] sm:$0xf]
  %v1424 = vld [vmem:[%s6 + $0xc] sm:$0xf]
  %v1425 = vld [vmem:[%s6 + $0x10] sm:$0xf]
  %v1426 = vld [vmem:[%s6 + $0x14] sm:$0xf]
  %v1427 = vld [vmem:[%s6 + $0x18] sm:$0xf]
  %v1428 = vld [vmem:[%s6 + $0x1c] sm:$0xf]
  %v1429 = vld [vmem:[%s6 + $0x20] sm:$0xf]
  %v1430 = vld [vmem:[%s6 + $0x24] sm:$0xf]
  %v1431 = vld [vmem:[%s6 + $0x28] sm:$0xf]
  %v1432 = vld [vmem:[%s6 + $0x2c] sm:$0xf]
  %v1433 = vld [vmem:[%s6 + $0x30] sm:$0xf]
  %v1434 = vld [vmem:[%s6 + $0x34] sm:$0xf]
  %v1435 = vld [vmem:[%s6 + $0x38] sm:$0xf]
  %v1436 = vld [vmem:[%s6 + $0x3c] sm:$0xf]
  %v1437 = vld [vmem:[%s6 + $0x40] sm:$0xf]
  %v1438 = vld [vmem:[%s6 + $0x44] sm:$0xf]
  %v1439 = vld [vmem:[%s6 + $0x48] sm:$0xf]
  %v1440 = vld [vmem:[%s6 + $0x4c] sm:$0xf]
  %v1441 = vld [vmem:[%s6 + $0x50] sm:$0xf]
  %v1442 = vld [vmem:[%s6 + $0x54] sm:$0xf]
  %v1443 = vld [vmem:[%s6 + $0x58] sm:$0xf]
  %v1444 = vld [vmem:[%s6 + $0x5c] sm:$0xf]
  %v1445 = vld [vmem:[%s7] sm:$0x1]
  %v1447 = vperm.slane %v1445, 0
  %v1473 = vunpack.c.l.b16 %v1421
  %v1474 = vunpack.c.l.b16 %v1422
  %v1475 = vunpack.c.l.b16 %v1423
  %v1476 = vunpack.c.l.b16 %v1424
  %v1477 = vunpack.c.l.b16 %v1425
  %v1478 = vunpack.c.l.b16 %v1426
  %v1479 = vunpack.c.l.b16 %v1427
  %v1480 = vunpack.c.l.b16 %v1428
  %v1481 = vunpack.c.l.b16 %v1429
  %v1482 = vunpack.c.l.b16 %v1430
  %v1483 = vunpack.c.l.b16 %v1431
  %v1484 = vunpack.c.l.b16 %v1432
  %v1485 = vunpack.c.l.b16 %v1433
  %v1486 = vunpack.c.l.b16 %v1434
  %v1487 = vunpack.c.l.b16 %v1435
  %v1488 = vunpack.c.l.b16 %v1436
  %v1489 = vunpack.c.l.b16 %v1437
  %v1490 = vunpack.c.l.b16 %v1438
  %v1491 = vunpack.c.l.b16 %v1439
  %v1492 = vunpack.c.l.b16 %v1440
  %v1493 = vunpack.c.l.b16 %v1441
  %v1494 = vunpack.c.l.b16 %v1442
  %v1495 = vunpack.c.l.b16 %v1443
  %v1496 = vunpack.c.l.b16 %v1444
  %v1497 = vpack.c.b16 %v1474, %v1473
  %v1498 = vpack.c.b16 %v1476, %v1475
  %v1499 = vpack.c.b16 %v1478, %v1477
  %v1500 = vpack.c.b16 %v1480, %v1479
  %v1501 = vpack.c.b16 %v1482, %v1481
  %v1502 = vpack.c.b16 %v1484, %v1483
  %v1503 = vpack.c.b16 %v1486, %v1485
  %v1504 = vpack.c.b16 %v1488, %v1487
  %v1505 = vpack.c.b16 %v1490, %v1489
  %v1506 = vpack.c.b16 %v1492, %v1491
  %v1507 = vpack.c.b16 %v1494, %v1493
  %v1508 = vpack.c.b16 %v1496, %v1495
  %v1522 = vsel %vm748, %v1418, 0
  %v1525 = vsel %vm748, %v1420, 0
  %1527 = vmatpush.bf16.msra.mxu0 %v1504
  %1528 = vmatpush.bf16.msra.mxu0 %v1503
  %1529 = vmatpush.bf16.msra.mxu0 %v1502
  %1530 = vmatpush.bf16.msra.mxu0 %v1501
  %1531 = vmatpush.bf16.msra.mxu0 %v1500
  %1532 = vmatpush.bf16.msra.mxu0 %v1499
  %1533 = vmatpush.bf16.msra.mxu0 %v1498
  %1534 = vmatpush.bf16.msra.mxu0 %v1497
  %1535 = vmatmul.bf16.gmra.mxu0 %v1417
  %v1536 = vpop.f32.mrf.mxu0
  %v1537 = vadd.f32 %v1447, %v1536
  %v1538 = vpop.f32.mrf.mxu0
  %v1539 = vadd.f32 %v1447, %v1538
  %1540 = vmatmul.bf16.gmra.mxu0 %v1419
  %v1541 = vpop.f32.mrf.mxu0
  %v1542 = vadd.f32 %v1447, %v1541
  %v1543 = vpop.f32.mrf.mxu0
  %v1544 = vadd.f32 %v1447, %v1543
  %1545 = vdwg.mxu0
  %1546 = vmatpush.bf16.msra.mxu0 0
  %1547 = vmatpush.bf16.msra.mxu0 0
  %1548 = vmatpush.bf16.msra.mxu0 0
  %1549 = vmatpush.bf16.msra.mxu0 0
  %1550 = vmatpush.bf16.msra.mxu0 %v1508
  %1551 = vmatpush.bf16.msra.mxu0 %v1507
  %1552 = vmatpush.bf16.msra.mxu0 %v1506
  %1553 = vmatpush.bf16.msra.mxu0 %v1505
  %1554 = vmatmul.bf16.gmra.mxu0 %v1522
  %v1555 = vpop.f32.mrf.mxu0
  %v1556 = vadd.f32 %v1537, %v1555
  %v1557 = vpop.f32.mrf.mxu0
  %v1558 = vadd.f32 %v1539, %v1557
  %1559 = vmatmul.bf16.gmra.mxu0 %v1525
  %v1560 = vpop.f32.mrf.mxu0
  %v1561 = vadd.f32 %v1542, %v1560
  %v1562 = vpop.f32.mrf.mxu0
  %v1563 = vadd.f32 %v1544, %v1562
  %1564 = vdwg.mxu0
  %1565 = vst [vmem:[%s8] sm:$0xff] %v1556
  %1566 = vst [vmem:[%s8 + $0x8] sm:$0xff] %v1558
  %1567 = vst [vmem:[%s8 + $0x10] sm:$0xff] %v1561
  %1568 = vst [vmem:[%s8 + $0x18] sm:$0xff] %v1563
  // Predicated region
  $region49: #{activate_graphsage_forward.1} parent=0 // pred_check
    _
  $region50: #{activate_graphsage_forward.1} parent=0 // pred_check_branch
    %1570 = sbr.rel (0) target = $region52
  $region51: #{activate_graphsage_forward.1} parent=0 // pred_region
    _
  $region52: #{activate_graphsage_forward.1} parent=0 // pred_fallthru
    _
  // Predicated region
  $region53: #{activate_graphsage_forward.1} parent=0 // pred_check
    _
  $region54: #{activate_graphsage_forward.1} parent=0 // pred_check_branch
    %1572 = sbr.rel (0) target = $region56
  $region55: #{activate_graphsage_forward.1} parent=0 // pred_region
    _
  $region56: #{activate_graphsage_forward.1} parent=0 // pred_fallthru
    _
  %1573 = vsyncmov [#allocation3]
  %s1574 = vpop.sfrf %1573
  %p1575 = scmp.eq.s32.totalorder %s1574, 0
  %p1576 = pneg %p1575
  %1578 = shalt.err (%p1576)

</llo_original>
